<compile_context>
chip_gen: v6e
topology: v6e:2x2x1
jax: 0.10.0
libtpu: 0.0.40
codegen_flags: <defaults>
</compile_context>

<pallas_src>
import functools

import jax
import jax.numpy as jnp
from jax import lax
from jax.experimental import pallas as pl
from jax.experimental.pallas import tpu as pltpu


# ---------------------------------------------------------------------------
# Fused kernel: GCN_Block #1 -> GCN_Block #2 (per batch element)
# ---------------------------------------------------------------------------
def _gcn_unet_down_kernel(x_ref,
                          wl1_1, bl1_1, wl2_1, bl2_1, wr1_1, wr2_1, br2_1, bre_1,
                          wl1_2, bl1_2, wl2_2, bl2_2, wr1_2, wr2_2, br2_2, bre_2,
                          o_ref, *, H, W, eps, slope):
    f32 = jnp.float32
    bf16 = jnp.bfloat16
    HW = H * W

    # ---- hoisted index vector + shift-validity masks (shared by both blocks) ----
    flat = lax.broadcasted_iota(jnp.int32, (1, HW), 1)
    if W & (W - 1) == 0:
        w_idx = jnp.bitwise_and(flat, W - 1)
    else:
        w_idx = flat % W
    offs = (-3, -2, -1, 1, 2, 3)
    col_ok = {o: jnp.logical_and(w_idx + o >= 0, w_idx + o < W) for o in offs}
    row_ok = {o: jnp.logical_and(flat + o * W >= 0, flat + o * W < HW) for o in offs}
    mw = jnp.logical_and(col_ok[3], col_ok[-3])   # conv_r1 valid-W window [3, W-3)

    def stack7(v, masks, step):
        # (C, HW) -> (7*C, HW); block t satisfies out[:, p] = v[:, p + (t-3)*step],
        # zero-filled outside the image.  XLU roll + one vsel per tap, no copies
        # through the vld/vst slots.
        parts = []
        for t in range(7):
            off = t - 3
            if off == 0:
                parts.append(v)
            else:
                rolled = pltpu.roll(v, (-off * step) % HW, axis=1)
                parts.append(jnp.where(masks[off], rolled, 0.0))
        return jnp.concatenate(parts, axis=0)

    def conv(w_ref, slab_f32):
        # single MXU pass: bf16 x bf16 -> f32 accumulate
        return jnp.dot(w_ref[...], slab_f32.astype(bf16),
                       preferred_element_type=f32)

    def gcn_block(v, wl1, bl1, wl2, bl2, wr1, wr2, br2, bre):
        # left path: conv_l1 (7,1) pad (3,0)  ->  conv_l2 (1,7) pad (0,3)
        xl1 = conv(wl1, stack7(v, row_ok, W)) + bl1[...]
        xl = conv(wl2, stack7(xl1, col_ok, 1)) + bl2[...]
        # right path: conv_r1 (1,7) pad (3,0)  ->  conv_r2 (7,1) pad (0,3)
        # (axis-swapped padding of the reference: data only valid on final columns
        #  [3, W-3); bias-only rows from conv_r1's H padding fold into
        #  bre = (sum_a Wr2_a) @ b_r1)
        d = jnp.where(mw, conv(wr1, stack7(v, col_ok, 1)), 0.0)
        xr = (conv(wr2, stack7(d, row_ok, W))
              + br2[...] + jnp.where(mw, bre[...], 0.0))
        # add -> InstanceNorm2d (two-pass, no E[x^2]-mean^2 cancellation) -> LeakyReLU
        y = xl + xr
        inv = 1.0 / float(HW)
        mean = jnp.sum(y, axis=-1, keepdims=True) * inv
        yc = y - mean
        var = jnp.sum(yc * yc, axis=-1, keepdims=True) * inv
        yn = yc * lax.rsqrt(var + eps)
        return jnp.maximum(yn, slope * yn)

    x = x_ref[0].astype(f32)                                   # (Cin_pad, HW), lane-dense
    y1 = gcn_block(x, wl1_1, bl1_1, wl2_1, bl2_1, wr1_1, wr2_1, br2_1, bre_1)
    y2 = gcn_block(y1, wl1_2, bl1_2, wl2_2, bl2_2, wr1_2, wr2_2, br2_2, bre_2)
    o_ref[0] = y2.astype(o_ref.dtype)


# ---------------------------------------------------------------------------
# pallas_call wrapper
# ---------------------------------------------------------------------------
def _const_spec(shape):
    zeros = (0,) * len(shape)
    return pl.BlockSpec(shape, lambda b, _z=zeros: _z)


_WKEYS = ("wl1", "bl1", "wl2", "bl2", "wr1", "wr2", "br2", "br1_eff")


def gcn_unet_block_down_pallas(x_flat, kp, H, W):
    """Fused l2(l1(x)): x_flat (N, Cin_pad, H*W) -> (N, Cout, H*W)."""
    n, cinp, hw = x_flat.shape
    cout = kp["b1"]["wl2"].shape[0]
    weights = [kp[blk][k] for blk in ("b1", "b2") for k in _WKEYS]
    kern = functools.partial(_gcn_unet_down_kernel, H=H, W=W, eps=1e-5, slope=0.2)
    return pl.pallas_call(
        kern,
        out_shape=jax.ShapeDtypeStruct((n, cout, hw), x_flat.dtype),
        grid=(n,),
        in_specs=[pl.BlockSpec((1, cinp, hw), lambda b: (b, 0, 0))]
                 + [_const_spec(w.shape) for w in weights],
        out_specs=pl.BlockSpec((1, cout, hw), lambda b: (b, 0, 0)),
        compiler_params=pltpu.CompilerParams(
            dimension_semantics=("parallel",),
            vmem_limit_bytes=48 * 1024 * 1024,   # leaves headroom on v7x's 64 MiB VMEM
        ),
    )(x_flat, *weights)


@jax.jit
def gcn_unet_block_down_forward(x_nchw, kparams):
    n, cin, h, w = x_nchw.shape
    cin_pad = kparams["b1"]["wl1"].shape[1] // 7     # static (slab width of block 1)
    cout = kparams["b2"]["wl2"].shape[0]
    x = x_nchw.reshape(n, cin, h * w)
    if cin_pad > cin:   # pad channels once to the f32 sublane tile (8)
        x = jnp.pad(x, ((0, 0), (0, cin_pad - cin), (0, 0)))
    y = gcn_unet_block_down_pallas(x, kparams, h, w)
    return y.reshape(n, cout, h, w)


# ---------------------------------------------------------------------------
# Parameters: PyTorch-layout init + one-time stacked/bf16 re-layout
# ---------------------------------------------------------------------------
def _init_conv(key, cout, cin, kh, kw):
    k1, k2 = jax.random.split(key)
    fan_in = cin * kh * kw
    bound = 1.0 / (fan_in ** 0.5)
    w = jax.random.uniform(k1, (cout, cin, kh, kw), jnp.float32, -bound, bound)
    b = jax.random.uniform(k2, (cout,), jnp.float32, -bound, bound)
    return w, b


def init_gcn_block(key, cin, cout, k=7):
    ks = jax.random.split(key, 4)
    wl1, bl1 = _init_conv(ks[0], cout, cin, k, 1)   # conv_l1: (k,1), pad (3,0)
    wl2, bl2 = _init_conv(ks[1], cout, cout, 1, k)  # conv_l2: (1,k), pad (0,3)
    wr1, br1 = _init_conv(ks[2], cout, cin, 1, k)   # conv_r1: (1,k), pad (3,0)
    wr2, br2 = _init_conv(ks[3], cout, cout, k, 1)  # conv_r2: (k,1), pad (0,3)
    return dict(wl1=wl1, bl1=bl1, wl2=wl2, bl2=bl2,
                wr1=wr1, br1=br1, wr2=wr2, br2=br2)


def init_gcn_unet_block_down(key, cin, cout):
    k1, k2 = jax.random.split(key)
    # l3 (1x1 conv) and dropout exist in __init__ but are unused in forward().
    return dict(l1=init_gcn_block(k1, cin, cout), l2=init_gcn_block(k2, cout, cout))


def _round_up(v, m):
    return -(-v // m) * m


def _stack_taps(w4, tap_axis, c_slab):
    """(Cout, Cin, kh, kw) -> (Cout, 7*c_slab) bf16, tap-major, channel-padded."""
    cout, cin = w4.shape[0], w4.shape[1]
    taps = w4[:, :, :, 0] if tap_axis == "h" else w4[:, :, 0, :]   # (Cout, Cin, 7)
    taps = jnp.transpose(taps, (0, 2, 1))                          # (Cout, 7, Cin)
    if cin < c_slab:
        taps = jnp.pad(taps, ((0, 0), (0, 0), (0, c_slab - cin)))
    return taps.reshape(cout, 7 * c_slab).astype(jnp.bfloat16)


def prepare_gcn_block(p, cin_slab):
    cout = p["wl1"].shape[0]
    wl1 = _stack_taps(p["wl1"], "h", cin_slab)   # conv_l1 (7,1)
    wl2 = _stack_taps(p["wl2"], "w", cout)       # conv_l2 (1,7)
    wr1 = _stack_taps(p["wr1"], "w", cin_slab)   # conv_r1 (1,7)
    wr2 = _stack_taps(p["wr2"], "h", cout)       # conv_r2 (7,1)
    s2 = jnp.sum(p["wr2"][:, :, :, 0], axis=2)   # sum_a Wr2_a
    br1_eff = jnp.dot(s2, p["br1"],
                      precision=lax.Precision.HIGHEST).reshape(cout, 1)
    return dict(wl1=wl1, bl1=p["bl1"].reshape(cout, 1).astype(jnp.float32),
                wl2=wl2, bl2=p["bl2"].reshape(cout, 1).astype(jnp.float32),
                wr1=wr1, wr2=wr2,
                br2=p["br2"].reshape(cout, 1).astype(jnp.float32),
                br1_eff=br1_eff.astype(jnp.float32))


def prepare_params(params, cin):
    cin_slab = _round_up(cin, 8)                       # f32 sublane tile
    cin_block2 = params["l2"]["wl1"].shape[1]          # = Cout of block 1
    return {"b1": prepare_gcn_block(params["l1"], cin_slab),
            "b2": prepare_gcn_block(params["l2"], cin_block2)}


# ---------------------------------------------------------------------------
# Pure-JAX reference (numerical validation of the Pallas path)
# ---------------------------------------------------------------------------
def _conv_ref(x, w, b, ph, pw):
    y = lax.conv_general_dilated(x, w, (1, 1), [(ph, ph), (pw, pw)],
                                 dimension_numbers=("NCHW", "OIHW", "NCHW"),
                                 precision=lax.Precision.HIGHEST)
    return y + b[None, :, None, None]


def _gcn_block_ref(x, p):
    xl = _conv_ref(x,  p["wl1"], p["bl1"], 3, 0)
    xl = _conv_ref(xl, p["wl2"], p["bl2"], 0, 3)
    xr = _conv_ref(x,  p["wr1"], p["br1"], 3, 0)
    xr = _conv_ref(xr, p["wr2"], p["br2"], 0, 3)
    y = xl + xr
    mean = jnp.mean(y, axis=(2, 3), keepdims=True)
    var = jnp.mean((y - mean) ** 2, axis=(2, 3), keepdims=True)
    y = (y - mean) * lax.rsqrt(var + 1e-5)
    return jnp.where(y >= 0.0, y, 0.2 * y)


def _ref_forward(x, params):
    return _gcn_block_ref(_gcn_block_ref(x, params["l1"]), params["l2"])


# ---------------------------------------------------------------------------
if __name__ == "__main__":
    key = jax.random.PRNGKey(0)
    kx, kp = jax.random.split(key)

    batch, in_channels, out_channels, H, W = 2, 4, 8, 16, 16
    x = jax.random.normal(kx, (batch, in_channels, H, W), jnp.float32)
    params = init_gcn_unet_block_down(kp, in_channels, out_channels)
    kparams = prepare_params(params, in_channels)    # stacked/bf16 re-layout, once

    out = jax.block_until_ready(gcn_unet_block_down_forward(x, kparams))
    assert out.shape == (batch, out_channels, H, W), out.shape

    ref = jax.block_until_ready(_ref_forward(x, params))
    # bf16 single-pass MXU operands vs f32 HIGHEST reference -> relaxed tolerance.
    max_err = float(jnp.max(jnp.abs(out - ref)))
    assert jnp.allclose(out, ref, rtol=2e-2, atol=5e-2), max_err

    print("KERNEL_OK")
</pallas_src>

<mosaic_0001>
module attributes {stable_mosaic.version = 11 : i64} {
  func.func @_gcn_unet_down_kernel(%arg0: i32, %arg1: memref<1x8x256xf32, #tpu.memory_space<vmem>>, %arg2: memref<8x56xbf16, #tpu.memory_space<vmem>>, %arg3: memref<8x1xf32, #tpu.memory_space<vmem>>, %arg4: memref<8x56xbf16, #tpu.memory_space<vmem>>, %arg5: memref<8x1xf32, #tpu.memory_space<vmem>>, %arg6: memref<8x56xbf16, #tpu.memory_space<vmem>>, %arg7: memref<8x56xbf16, #tpu.memory_space<vmem>>, %arg8: memref<8x1xf32, #tpu.memory_space<vmem>>, %arg9: memref<8x1xf32, #tpu.memory_space<vmem>>, %arg10: memref<8x56xbf16, #tpu.memory_space<vmem>>, %arg11: memref<8x1xf32, #tpu.memory_space<vmem>>, %arg12: memref<8x56xbf16, #tpu.memory_space<vmem>>, %arg13: memref<8x1xf32, #tpu.memory_space<vmem>>, %arg14: memref<8x56xbf16, #tpu.memory_space<vmem>>, %arg15: memref<8x56xbf16, #tpu.memory_space<vmem>>, %arg16: memref<8x1xf32, #tpu.memory_space<vmem>>, %arg17: memref<8x1xf32, #tpu.memory_space<vmem>>, %arg18: memref<1x8x256xf32, #tpu.memory_space<vmem>>) attributes {dimension_semantics = [#tpu.dimension_semantics<parallel>], iteration_bounds = array<i64: 2>, scalar_prefetch = 0 : i64, scratch_operands = 0 : i64, tpu.core_type = #tpu.core_type<tc>, window_params = [{transform_indices = @transform_0, window_bounds = array<i64: 1, 8, 256>}, {pipeline_mode = #tpu.pipeline_mode<synchronous>, transform_indices = @transform_1, window_bounds = array<i64: 8, 56>}, {pipeline_mode = #tpu.pipeline_mode<synchronous>, transform_indices = @transform_2, window_bounds = array<i64: 8, 1>}, {pipeline_mode = #tpu.pipeline_mode<synchronous>, transform_indices = @transform_3, window_bounds = array<i64: 8, 56>}, {pipeline_mode = #tpu.pipeline_mode<synchronous>, transform_indices = @transform_4, window_bounds = array<i64: 8, 1>}, {pipeline_mode = #tpu.pipeline_mode<synchronous>, transform_indices = @transform_5, window_bounds = array<i64: 8, 56>}, {pipeline_mode = #tpu.pipeline_mode<synchronous>, transform_indices = @transform_6, window_bounds = array<i64: 8, 56>}, {pipeline_mode = #tpu.pipeline_mode<synchronous>, transform_indices = @transform_7, window_bounds = array<i64: 8, 1>}, {pipeline_mode = #tpu.pipeline_mode<synchronous>, transform_indices = @transform_8, window_bounds = array<i64: 8, 1>}, {pipeline_mode = #tpu.pipeline_mode<synchronous>, transform_indices = @transform_9, window_bounds = array<i64: 8, 56>}, {pipeline_mode = #tpu.pipeline_mode<synchronous>, transform_indices = @transform_10, window_bounds = array<i64: 8, 1>}, {pipeline_mode = #tpu.pipeline_mode<synchronous>, transform_indices = @transform_11, window_bounds = array<i64: 8, 56>}, {pipeline_mode = #tpu.pipeline_mode<synchronous>, transform_indices = @transform_12, window_bounds = array<i64: 8, 1>}, {pipeline_mode = #tpu.pipeline_mode<synchronous>, transform_indices = @transform_13, window_bounds = array<i64: 8, 56>}, {pipeline_mode = #tpu.pipeline_mode<synchronous>, transform_indices = @transform_14, window_bounds = array<i64: 8, 56>}, {pipeline_mode = #tpu.pipeline_mode<synchronous>, transform_indices = @transform_15, window_bounds = array<i64: 8, 1>}, {pipeline_mode = #tpu.pipeline_mode<synchronous>, transform_indices = @transform_16, window_bounds = array<i64: 8, 1>}, {transform_indices = @transform_17, window_bounds = array<i64: 1, 8, 256>}]} {
    %0 = tpu.iota {dimensions = array<i32: 1>} : vector<1x256xi32>
    %c15_i32 = arith.constant 15 : i32
    %1 = vector.broadcast %c15_i32 : i32 to vector<1x256xi32>
    %2 = arith.andi %0, %1 : vector<1x256xi32>
    %c-3_i32 = arith.constant -3 : i32
    %3 = vector.broadcast %c-3_i32 : i32 to vector<1x256xi32>
    %4 = arith.addi %2, %3 : vector<1x256xi32>
    %c0_i32 = arith.constant 0 : i32
    %5 = vector.broadcast %c0_i32 : i32 to vector<1x256xi32>
    %6 = arith.cmpi sge, %4, %5 : vector<1x256xi32>
    %c-3_i32_0 = arith.constant -3 : i32
    %7 = vector.broadcast %c-3_i32_0 : i32 to vector<1x256xi32>
    %8 = arith.addi %2, %7 : vector<1x256xi32>
    %c16_i32 = arith.constant 16 : i32
    %9 = vector.broadcast %c16_i32 : i32 to vector<1x256xi32>
    %10 = arith.cmpi slt, %8, %9 : vector<1x256xi32>
    %11 = arith.andi %6, %10 : vector<1x256xi1>
    %c-2_i32 = arith.constant -2 : i32
    %12 = vector.broadcast %c-2_i32 : i32 to vector<1x256xi32>
    %13 = arith.addi %2, %12 : vector<1x256xi32>
    %c0_i32_1 = arith.constant 0 : i32
    %14 = vector.broadcast %c0_i32_1 : i32 to vector<1x256xi32>
    %15 = arith.cmpi sge, %13, %14 : vector<1x256xi32>
    %c-2_i32_2 = arith.constant -2 : i32
    %16 = vector.broadcast %c-2_i32_2 : i32 to vector<1x256xi32>
    %17 = arith.addi %2, %16 : vector<1x256xi32>
    %c16_i32_3 = arith.constant 16 : i32
    %18 = vector.broadcast %c16_i32_3 : i32 to vector<1x256xi32>
    %19 = arith.cmpi slt, %17, %18 : vector<1x256xi32>
    %20 = arith.andi %15, %19 : vector<1x256xi1>
    %c-1_i32 = arith.constant -1 : i32
    %21 = vector.broadcast %c-1_i32 : i32 to vector<1x256xi32>
    %22 = arith.addi %2, %21 : vector<1x256xi32>
    %c0_i32_4 = arith.constant 0 : i32
    %23 = vector.broadcast %c0_i32_4 : i32 to vector<1x256xi32>
    %24 = arith.cmpi sge, %22, %23 : vector<1x256xi32>
    %c-1_i32_5 = arith.constant -1 : i32
    %25 = vector.broadcast %c-1_i32_5 : i32 to vector<1x256xi32>
    %26 = arith.addi %2, %25 : vector<1x256xi32>
    %c16_i32_6 = arith.constant 16 : i32
    %27 = vector.broadcast %c16_i32_6 : i32 to vector<1x256xi32>
    %28 = arith.cmpi slt, %26, %27 : vector<1x256xi32>
    %29 = arith.andi %24, %28 : vector<1x256xi1>
    %c1_i32 = arith.constant 1 : i32
    %30 = vector.broadcast %c1_i32 : i32 to vector<1x256xi32>
    %31 = arith.addi %2, %30 : vector<1x256xi32>
    %c0_i32_7 = arith.constant 0 : i32
    %32 = vector.broadcast %c0_i32_7 : i32 to vector<1x256xi32>
    %33 = arith.cmpi sge, %31, %32 : vector<1x256xi32>
    %c1_i32_8 = arith.constant 1 : i32
    %34 = vector.broadcast %c1_i32_8 : i32 to vector<1x256xi32>
    %35 = arith.addi %2, %34 : vector<1x256xi32>
    %c16_i32_9 = arith.constant 16 : i32
    %36 = vector.broadcast %c16_i32_9 : i32 to vector<1x256xi32>
    %37 = arith.cmpi slt, %35, %36 : vector<1x256xi32>
    %38 = arith.andi %33, %37 : vector<1x256xi1>
    %c2_i32 = arith.constant 2 : i32
    %39 = vector.broadcast %c2_i32 : i32 to vector<1x256xi32>
    %40 = arith.addi %2, %39 : vector<1x256xi32>
    %c0_i32_10 = arith.constant 0 : i32
    %41 = vector.broadcast %c0_i32_10 : i32 to vector<1x256xi32>
    %42 = arith.cmpi sge, %40, %41 : vector<1x256xi32>
    %c2_i32_11 = arith.constant 2 : i32
    %43 = vector.broadcast %c2_i32_11 : i32 to vector<1x256xi32>
    %44 = arith.addi %2, %43 : vector<1x256xi32>
    %c16_i32_12 = arith.constant 16 : i32
    %45 = vector.broadcast %c16_i32_12 : i32 to vector<1x256xi32>
    %46 = arith.cmpi slt, %44, %45 : vector<1x256xi32>
    %47 = arith.andi %42, %46 : vector<1x256xi1>
    %c3_i32 = arith.constant 3 : i32
    %48 = vector.broadcast %c3_i32 : i32 to vector<1x256xi32>
    %49 = arith.addi %2, %48 : vector<1x256xi32>
    %c0_i32_13 = arith.constant 0 : i32
    %50 = vector.broadcast %c0_i32_13 : i32 to vector<1x256xi32>
    %51 = arith.cmpi sge, %49, %50 : vector<1x256xi32>
    %c3_i32_14 = arith.constant 3 : i32
    %52 = vector.broadcast %c3_i32_14 : i32 to vector<1x256xi32>
    %53 = arith.addi %2, %52 : vector<1x256xi32>
    %c16_i32_15 = arith.constant 16 : i32
    %54 = vector.broadcast %c16_i32_15 : i32 to vector<1x256xi32>
    %55 = arith.cmpi slt, %53, %54 : vector<1x256xi32>
    %56 = arith.andi %51, %55 : vector<1x256xi1>
    %c-48_i32 = arith.constant -48 : i32
    %57 = vector.broadcast %c-48_i32 : i32 to vector<1x256xi32>
    %58 = arith.addi %0, %57 : vector<1x256xi32>
    %c0_i32_16 = arith.constant 0 : i32
    %59 = vector.broadcast %c0_i32_16 : i32 to vector<1x256xi32>
    %60 = arith.cmpi sge, %58, %59 : vector<1x256xi32>
    %c-48_i32_17 = arith.constant -48 : i32
    %61 = vector.broadcast %c-48_i32_17 : i32 to vector<1x256xi32>
    %62 = arith.addi %0, %61 : vector<1x256xi32>
    %c256_i32 = arith.constant 256 : i32
    %63 = vector.broadcast %c256_i32 : i32 to vector<1x256xi32>
    %64 = arith.cmpi slt, %62, %63 : vector<1x256xi32>
    %65 = arith.andi %60, %64 : vector<1x256xi1>
    %c-32_i32 = arith.constant -32 : i32
    %66 = vector.broadcast %c-32_i32 : i32 to vector<1x256xi32>
    %67 = arith.addi %0, %66 : vector<1x256xi32>
    %c0_i32_18 = arith.constant 0 : i32
    %68 = vector.broadcast %c0_i32_18 : i32 to vector<1x256xi32>
    %69 = arith.cmpi sge, %67, %68 : vector<1x256xi32>
    %c-32_i32_19 = arith.constant -32 : i32
    %70 = vector.broadcast %c-32_i32_19 : i32 to vector<1x256xi32>
    %71 = arith.addi %0, %70 : vector<1x256xi32>
    %c256_i32_20 = arith.constant 256 : i32
    %72 = vector.broadcast %c256_i32_20 : i32 to vector<1x256xi32>
    %73 = arith.cmpi slt, %71, %72 : vector<1x256xi32>
    %74 = arith.andi %69, %73 : vector<1x256xi1>
    %c-16_i32 = arith.constant -16 : i32
    %75 = vector.broadcast %c-16_i32 : i32 to vector<1x256xi32>
    %76 = arith.addi %0, %75 : vector<1x256xi32>
    %c0_i32_21 = arith.constant 0 : i32
    %77 = vector.broadcast %c0_i32_21 : i32 to vector<1x256xi32>
    %78 = arith.cmpi sge, %76, %77 : vector<1x256xi32>
    %c-16_i32_22 = arith.constant -16 : i32
    %79 = vector.broadcast %c-16_i32_22 : i32 to vector<1x256xi32>
    %80 = arith.addi %0, %79 : vector<1x256xi32>
    %c256_i32_23 = arith.constant 256 : i32
    %81 = vector.broadcast %c256_i32_23 : i32 to vector<1x256xi32>
    %82 = arith.cmpi slt, %80, %81 : vector<1x256xi32>
    %83 = arith.andi %78, %82 : vector<1x256xi1>
    %c16_i32_24 = arith.constant 16 : i32
    %84 = vector.broadcast %c16_i32_24 : i32 to vector<1x256xi32>
    %85 = arith.addi %0, %84 : vector<1x256xi32>
    %c0_i32_25 = arith.constant 0 : i32
    %86 = vector.broadcast %c0_i32_25 : i32 to vector<1x256xi32>
    %87 = arith.cmpi sge, %85, %86 : vector<1x256xi32>
    %c16_i32_26 = arith.constant 16 : i32
    %88 = vector.broadcast %c16_i32_26 : i32 to vector<1x256xi32>
    %89 = arith.addi %0, %88 : vector<1x256xi32>
    %c256_i32_27 = arith.constant 256 : i32
    %90 = vector.broadcast %c256_i32_27 : i32 to vector<1x256xi32>
    %91 = arith.cmpi slt, %89, %90 : vector<1x256xi32>
    %92 = arith.andi %87, %91 : vector<1x256xi1>
    %c32_i32 = arith.constant 32 : i32
    %93 = vector.broadcast %c32_i32 : i32 to vector<1x256xi32>
    %94 = arith.addi %0, %93 : vector<1x256xi32>
    %c0_i32_28 = arith.constant 0 : i32
    %95 = vector.broadcast %c0_i32_28 : i32 to vector<1x256xi32>
    %96 = arith.cmpi sge, %94, %95 : vector<1x256xi32>
    %c32_i32_29 = arith.constant 32 : i32
    %97 = vector.broadcast %c32_i32_29 : i32 to vector<1x256xi32>
    %98 = arith.addi %0, %97 : vector<1x256xi32>
    %c256_i32_30 = arith.constant 256 : i32
    %99 = vector.broadcast %c256_i32_30 : i32 to vector<1x256xi32>
    %100 = arith.cmpi slt, %98, %99 : vector<1x256xi32>
    %101 = arith.andi %96, %100 : vector<1x256xi1>
    %c48_i32 = arith.constant 48 : i32
    %102 = vector.broadcast %c48_i32 : i32 to vector<1x256xi32>
    %103 = arith.addi %0, %102 : vector<1x256xi32>
    %c0_i32_31 = arith.constant 0 : i32
    %104 = vector.broadcast %c0_i32_31 : i32 to vector<1x256xi32>
    %105 = arith.cmpi sge, %103, %104 : vector<1x256xi32>
    %c48_i32_32 = arith.constant 48 : i32
    %106 = vector.broadcast %c48_i32_32 : i32 to vector<1x256xi32>
    %107 = arith.addi %0, %106 : vector<1x256xi32>
    %c256_i32_33 = arith.constant 256 : i32
    %108 = vector.broadcast %c256_i32_33 : i32 to vector<1x256xi32>
    %109 = arith.cmpi slt, %107, %108 : vector<1x256xi32>
    %110 = arith.andi %105, %109 : vector<1x256xi1>
    %111 = arith.andi %56, %11 : vector<1x256xi1>
    %c0 = arith.constant 0 : index
    %c0_34 = arith.constant 0 : index
    %c0_35 = arith.constant 0 : index
    %112 = vector.load %arg1[%c0, %c0_34, %c0_35] : memref<1x8x256xf32, #tpu.memory_space<vmem>>, vector<1x8x256xf32>
    %113 = vector.shape_cast %112 : vector<1x8x256xf32> to vector<8x256xf32>
    %c48_i32_36 = arith.constant 48 : i32
    %114 = tpu.dynamic_rotate %113 by %c48_i32_36 dim 1 : vector<8x256xf32>, i32 -> vector<8x256xf32>
    %cst = arith.constant 0.000000e+00 : f32
    %115 = vector.shape_cast %65 : vector<1x256xi1> to vector<1x256xi1>
    %116 = vector.broadcast %115 : vector<1x256xi1> to vector<8x256xi1>
    %117 = vector.broadcast %cst : f32 to vector<8x256xf32>
    %118 = arith.select %116, %114, %117 : vector<8x256xi1>, vector<8x256xf32>
    %c32_i32_37 = arith.constant 32 : i32
    %119 = tpu.dynamic_rotate %113 by %c32_i32_37 dim 1 : vector<8x256xf32>, i32 -> vector<8x256xf32>
    %cst_38 = arith.constant 0.000000e+00 : f32
    %120 = vector.shape_cast %74 : vector<1x256xi1> to vector<1x256xi1>
    %121 = vector.broadcast %120 : vector<1x256xi1> to vector<8x256xi1>
    %122 = vector.broadcast %cst_38 : f32 to vector<8x256xf32>
    %123 = arith.select %121, %119, %122 : vector<8x256xi1>, vector<8x256xf32>
    %c16_i32_39 = arith.constant 16 : i32
    %124 = tpu.dynamic_rotate %113 by %c16_i32_39 dim 1 : vector<8x256xf32>, i32 -> vector<8x256xf32>
    %cst_40 = arith.constant 0.000000e+00 : f32
    %125 = vector.shape_cast %83 : vector<1x256xi1> to vector<1x256xi1>
    %126 = vector.broadcast %125 : vector<1x256xi1> to vector<8x256xi1>
    %127 = vector.broadcast %cst_40 : f32 to vector<8x256xf32>
    %128 = arith.select %126, %124, %127 : vector<8x256xi1>, vector<8x256xf32>
    %c240_i32 = arith.constant 240 : i32
    %129 = tpu.dynamic_rotate %113 by %c240_i32 dim 1 : vector<8x256xf32>, i32 -> vector<8x256xf32>
    %cst_41 = arith.constant 0.000000e+00 : f32
    %130 = vector.shape_cast %92 : vector<1x256xi1> to vector<1x256xi1>
    %131 = vector.broadcast %130 : vector<1x256xi1> to vector<8x256xi1>
    %132 = vector.broadcast %cst_41 : f32 to vector<8x256xf32>
    %133 = arith.select %131, %129, %132 : vector<8x256xi1>, vector<8x256xf32>
    %c224_i32 = arith.constant 224 : i32
    %134 = tpu.dynamic_rotate %113 by %c224_i32 dim 1 : vector<8x256xf32>, i32 -> vector<8x256xf32>
    %cst_42 = arith.constant 0.000000e+00 : f32
    %135 = vector.shape_cast %101 : vector<1x256xi1> to vector<1x256xi1>
    %136 = vector.broadcast %135 : vector<1x256xi1> to vector<8x256xi1>
    %137 = vector.broadcast %cst_42 : f32 to vector<8x256xf32>
    %138 = arith.select %136, %134, %137 : vector<8x256xi1>, vector<8x256xf32>
    %c208_i32 = arith.constant 208 : i32
    %139 = tpu.dynamic_rotate %113 by %c208_i32 dim 1 : vector<8x256xf32>, i32 -> vector<8x256xf32>
    %cst_43 = arith.constant 0.000000e+00 : f32
    %140 = vector.shape_cast %110 : vector<1x256xi1> to vector<1x256xi1>
    %141 = vector.broadcast %140 : vector<1x256xi1> to vector<8x256xi1>
    %142 = vector.broadcast %cst_43 : f32 to vector<8x256xf32>
    %143 = arith.select %141, %139, %142 : vector<8x256xi1>, vector<8x256xf32>
    %144 = tpu.concatenate %118, %123, %128, %113, %133, %138, %143 in 0 : vector<8x256xf32>, vector<8x256xf32>, vector<8x256xf32>, vector<8x256xf32>, vector<8x256xf32>, vector<8x256xf32>, vector<8x256xf32> -> vector<56x256xf32>
    %c0_44 = arith.constant 0 : index
    %c0_45 = arith.constant 0 : index
    %145 = vector.load %arg2[%c0_44, %c0_45] : memref<8x56xbf16, #tpu.memory_space<vmem>>, vector<8x56xbf16>
    %146 = arith.truncf %144 : vector<56x256xf32> to vector<56x256xbf16>
    %cst_46 = arith.constant dense<0.000000e+00> : vector<8x256xf32>
    %147 = tpu.matmul %145, %146, %cst_46 {dimension_numbers = #tpu.dot_dimension_numbers<[1], [0], [0], [1], [0, 0, 1, 1], [], []>} : vector<8x56xbf16>, vector<56x256xbf16>, vector<8x256xf32> -> vector<8x256xf32>
    %c0_47 = arith.constant 0 : index
    %c0_48 = arith.constant 0 : index
    %148 = vector.load %arg3[%c0_47, %c0_48] : memref<8x1xf32, #tpu.memory_space<vmem>>, vector<8x1xf32>
    %149 = vector.broadcast %148 : vector<8x1xf32> to vector<8x256xf32>
    %150 = arith.addf %147, %149 : vector<8x256xf32>
    %c3_i32_49 = arith.constant 3 : i32
    %151 = tpu.dynamic_rotate %150 by %c3_i32_49 dim 1 : vector<8x256xf32>, i32 -> vector<8x256xf32>
    %cst_50 = arith.constant 0.000000e+00 : f32
    %152 = vector.shape_cast %11 : vector<1x256xi1> to vector<1x256xi1>
    %153 = vector.broadcast %152 : vector<1x256xi1> to vector<8x256xi1>
    %154 = vector.broadcast %cst_50 : f32 to vector<8x256xf32>
    %155 = arith.select %153, %151, %154 : vector<8x256xi1>, vector<8x256xf32>
    %c2_i32_51 = arith.constant 2 : i32
    %156 = tpu.dynamic_rotate %150 by %c2_i32_51 dim 1 : vector<8x256xf32>, i32 -> vector<8x256xf32>
    %cst_52 = arith.constant 0.000000e+00 : f32
    %157 = vector.shape_cast %20 : vector<1x256xi1> to vector<1x256xi1>
    %158 = vector.broadcast %157 : vector<1x256xi1> to vector<8x256xi1>
    %159 = vector.broadcast %cst_52 : f32 to vector<8x256xf32>
    %160 = arith.select %158, %156, %159 : vector<8x256xi1>, vector<8x256xf32>
    %c1_i32_53 = arith.constant 1 : i32
    %161 = tpu.dynamic_rotate %150 by %c1_i32_53 dim 1 : vector<8x256xf32>, i32 -> vector<8x256xf32>
    %cst_54 = arith.constant 0.000000e+00 : f32
    %162 = vector.shape_cast %29 : vector<1x256xi1> to vector<1x256xi1>
    %163 = vector.broadcast %162 : vector<1x256xi1> to vector<8x256xi1>
    %164 = vector.broadcast %cst_54 : f32 to vector<8x256xf32>
    %165 = arith.select %163, %161, %164 : vector<8x256xi1>, vector<8x256xf32>
    %c255_i32 = arith.constant 255 : i32
    %166 = tpu.dynamic_rotate %150 by %c255_i32 dim 1 : vector<8x256xf32>, i32 -> vector<8x256xf32>
    %cst_55 = arith.constant 0.000000e+00 : f32
    %167 = vector.shape_cast %38 : vector<1x256xi1> to vector<1x256xi1>
    %168 = vector.broadcast %167 : vector<1x256xi1> to vector<8x256xi1>
    %169 = vector.broadcast %cst_55 : f32 to vector<8x256xf32>
    %170 = arith.select %168, %166, %169 : vector<8x256xi1>, vector<8x256xf32>
    %c254_i32 = arith.constant 254 : i32
    %171 = tpu.dynamic_rotate %150 by %c254_i32 dim 1 : vector<8x256xf32>, i32 -> vector<8x256xf32>
    %cst_56 = arith.constant 0.000000e+00 : f32
    %172 = vector.shape_cast %47 : vector<1x256xi1> to vector<1x256xi1>
    %173 = vector.broadcast %172 : vector<1x256xi1> to vector<8x256xi1>
    %174 = vector.broadcast %cst_56 : f32 to vector<8x256xf32>
    %175 = arith.select %173, %171, %174 : vector<8x256xi1>, vector<8x256xf32>
    %c253_i32 = arith.constant 253 : i32
    %176 = tpu.dynamic_rotate %150 by %c253_i32 dim 1 : vector<8x256xf32>, i32 -> vector<8x256xf32>
    %cst_57 = arith.constant 0.000000e+00 : f32
    %177 = vector.shape_cast %56 : vector<1x256xi1> to vector<1x256xi1>
    %178 = vector.broadcast %177 : vector<1x256xi1> to vector<8x256xi1>
    %179 = vector.broadcast %cst_57 : f32 to vector<8x256xf32>
    %180 = arith.select %178, %176, %179 : vector<8x256xi1>, vector<8x256xf32>
    %181 = tpu.concatenate %155, %160, %165, %150, %170, %175, %180 in 0 : vector<8x256xf32>, vector<8x256xf32>, vector<8x256xf32>, vector<8x256xf32>, vector<8x256xf32>, vector<8x256xf32>, vector<8x256xf32> -> vector<56x256xf32>
    %c0_58 = arith.constant 0 : index
    %c0_59 = arith.constant 0 : index
    %182 = vector.load %arg4[%c0_58, %c0_59] : memref<8x56xbf16, #tpu.memory_space<vmem>>, vector<8x56xbf16>
    %183 = arith.truncf %181 : vector<56x256xf32> to vector<56x256xbf16>
    %cst_60 = arith.constant dense<0.000000e+00> : vector<8x256xf32>
    %184 = tpu.matmul %182, %183, %cst_60 {dimension_numbers = #tpu.dot_dimension_numbers<[1], [0], [0], [1], [0, 0, 1, 1], [], []>} : vector<8x56xbf16>, vector<56x256xbf16>, vector<8x256xf32> -> vector<8x256xf32>
    %c0_61 = arith.constant 0 : index
    %c0_62 = arith.constant 0 : index
    %185 = vector.load %arg5[%c0_61, %c0_62] : memref<8x1xf32, #tpu.memory_space<vmem>>, vector<8x1xf32>
    %186 = vector.broadcast %185 : vector<8x1xf32> to vector<8x256xf32>
    %187 = arith.addf %184, %186 : vector<8x256xf32>
    %c3_i32_63 = arith.constant 3 : i32
    %188 = tpu.dynamic_rotate %113 by %c3_i32_63 dim 1 : vector<8x256xf32>, i32 -> vector<8x256xf32>
    %cst_64 = arith.constant 0.000000e+00 : f32
    %189 = vector.shape_cast %11 : vector<1x256xi1> to vector<1x256xi1>
    %190 = vector.broadcast %189 : vector<1x256xi1> to vector<8x256xi1>
    %191 = vector.broadcast %cst_64 : f32 to vector<8x256xf32>
    %192 = arith.select %190, %188, %191 : vector<8x256xi1>, vector<8x256xf32>
    %c2_i32_65 = arith.constant 2 : i32
    %193 = tpu.dynamic_rotate %113 by %c2_i32_65 dim 1 : vector<8x256xf32>, i32 -> vector<8x256xf32>
    %cst_66 = arith.constant 0.000000e+00 : f32
    %194 = vector.shape_cast %20 : vector<1x256xi1> to vector<1x256xi1>
    %195 = vector.broadcast %194 : vector<1x256xi1> to vector<8x256xi1>
    %196 = vector.broadcast %cst_66 : f32 to vector<8x256xf32>
    %197 = arith.select %195, %193, %196 : vector<8x256xi1>, vector<8x256xf32>
    %c1_i32_67 = arith.constant 1 : i32
    %198 = tpu.dynamic_rotate %113 by %c1_i32_67 dim 1 : vector<8x256xf32>, i32 -> vector<8x256xf32>
    %cst_68 = arith.constant 0.000000e+00 : f32
    %199 = vector.shape_cast %29 : vector<1x256xi1> to vector<1x256xi1>
    %200 = vector.broadcast %199 : vector<1x256xi1> to vector<8x256xi1>
    %201 = vector.broadcast %cst_68 : f32 to vector<8x256xf32>
    %202 = arith.select %200, %198, %201 : vector<8x256xi1>, vector<8x256xf32>
    %c255_i32_69 = arith.constant 255 : i32
    %203 = tpu.dynamic_rotate %113 by %c255_i32_69 dim 1 : vector<8x256xf32>, i32 -> vector<8x256xf32>
    %cst_70 = arith.constant 0.000000e+00 : f32
    %204 = vector.shape_cast %38 : vector<1x256xi1> to vector<1x256xi1>
    %205 = vector.broadcast %204 : vector<1x256xi1> to vector<8x256xi1>
    %206 = vector.broadcast %cst_70 : f32 to vector<8x256xf32>
    %207 = arith.select %205, %203, %206 : vector<8x256xi1>, vector<8x256xf32>
    %c254_i32_71 = arith.constant 254 : i32
    %208 = tpu.dynamic_rotate %113 by %c254_i32_71 dim 1 : vector<8x256xf32>, i32 -> vector<8x256xf32>
    %cst_72 = arith.constant 0.000000e+00 : f32
    %209 = vector.shape_cast %47 : vector<1x256xi1> to vector<1x256xi1>
    %210 = vector.broadcast %209 : vector<1x256xi1> to vector<8x256xi1>
    %211 = vector.broadcast %cst_72 : f32 to vector<8x256xf32>
    %212 = arith.select %210, %208, %211 : vector<8x256xi1>, vector<8x256xf32>
    %c253_i32_73 = arith.constant 253 : i32
    %213 = tpu.dynamic_rotate %113 by %c253_i32_73 dim 1 : vector<8x256xf32>, i32 -> vector<8x256xf32>
    %cst_74 = arith.constant 0.000000e+00 : f32
    %214 = vector.shape_cast %56 : vector<1x256xi1> to vector<1x256xi1>
    %215 = vector.broadcast %214 : vector<1x256xi1> to vector<8x256xi1>
    %216 = vector.broadcast %cst_74 : f32 to vector<8x256xf32>
    %217 = arith.select %215, %213, %216 : vector<8x256xi1>, vector<8x256xf32>
    %218 = tpu.concatenate %192, %197, %202, %113, %207, %212, %217 in 0 : vector<8x256xf32>, vector<8x256xf32>, vector<8x256xf32>, vector<8x256xf32>, vector<8x256xf32>, vector<8x256xf32>, vector<8x256xf32> -> vector<56x256xf32>
    %c0_75 = arith.constant 0 : index
    %c0_76 = arith.constant 0 : index
    %219 = vector.load %arg6[%c0_75, %c0_76] : memref<8x56xbf16, #tpu.memory_space<vmem>>, vector<8x56xbf16>
    %220 = arith.truncf %218 : vector<56x256xf32> to vector<56x256xbf16>
    %cst_77 = arith.constant dense<0.000000e+00> : vector<8x256xf32>
    %221 = tpu.matmul %219, %220, %cst_77 {dimension_numbers = #tpu.dot_dimension_numbers<[1], [0], [0], [1], [0, 0, 1, 1], [], []>} : vector<8x56xbf16>, vector<56x256xbf16>, vector<8x256xf32> -> vector<8x256xf32>
    %cst_78 = arith.constant 0.000000e+00 : f32
    %222 = vector.shape_cast %111 : vector<1x256xi1> to vector<1x256xi1>
    %223 = vector.broadcast %222 : vector<1x256xi1> to vector<8x256xi1>
    %224 = vector.broadcast %cst_78 : f32 to vector<8x256xf32>
    %225 = arith.select %223, %221, %224 : vector<8x256xi1>, vector<8x256xf32>
    %c48_i32_79 = arith.constant 48 : i32
    %226 = tpu.dynamic_rotate %225 by %c48_i32_79 dim 1 : vector<8x256xf32>, i32 -> vector<8x256xf32>
    %cst_80 = arith.constant 0.000000e+00 : f32
    %227 = vector.shape_cast %65 : vector<1x256xi1> to vector<1x256xi1>
    %228 = vector.broadcast %227 : vector<1x256xi1> to vector<8x256xi1>
    %229 = vector.broadcast %cst_80 : f32 to vector<8x256xf32>
    %230 = arith.select %228, %226, %229 : vector<8x256xi1>, vector<8x256xf32>
    %c32_i32_81 = arith.constant 32 : i32
    %231 = tpu.dynamic_rotate %225 by %c32_i32_81 dim 1 : vector<8x256xf32>, i32 -> vector<8x256xf32>
    %cst_82 = arith.constant 0.000000e+00 : f32
    %232 = vector.shape_cast %74 : vector<1x256xi1> to vector<1x256xi1>
    %233 = vector.broadcast %232 : vector<1x256xi1> to vector<8x256xi1>
    %234 = vector.broadcast %cst_82 : f32 to vector<8x256xf32>
    %235 = arith.select %233, %231, %234 : vector<8x256xi1>, vector<8x256xf32>
    %c16_i32_83 = arith.constant 16 : i32
    %236 = tpu.dynamic_rotate %225 by %c16_i32_83 dim 1 : vector<8x256xf32>, i32 -> vector<8x256xf32>
    %cst_84 = arith.constant 0.000000e+00 : f32
    %237 = vector.shape_cast %83 : vector<1x256xi1> to vector<1x256xi1>
    %238 = vector.broadcast %237 : vector<1x256xi1> to vector<8x256xi1>
    %239 = vector.broadcast %cst_84 : f32 to vector<8x256xf32>
    %240 = arith.select %238, %236, %239 : vector<8x256xi1>, vector<8x256xf32>
    %c240_i32_85 = arith.constant 240 : i32
    %241 = tpu.dynamic_rotate %225 by %c240_i32_85 dim 1 : vector<8x256xf32>, i32 -> vector<8x256xf32>
    %cst_86 = arith.constant 0.000000e+00 : f32
    %242 = vector.shape_cast %92 : vector<1x256xi1> to vector<1x256xi1>
    %243 = vector.broadcast %242 : vector<1x256xi1> to vector<8x256xi1>
    %244 = vector.broadcast %cst_86 : f32 to vector<8x256xf32>
    %245 = arith.select %243, %241, %244 : vector<8x256xi1>, vector<8x256xf32>
    %c224_i32_87 = arith.constant 224 : i32
    %246 = tpu.dynamic_rotate %225 by %c224_i32_87 dim 1 : vector<8x256xf32>, i32 -> vector<8x256xf32>
    %cst_88 = arith.constant 0.000000e+00 : f32
    %247 = vector.shape_cast %101 : vector<1x256xi1> to vector<1x256xi1>
    %248 = vector.broadcast %247 : vector<1x256xi1> to vector<8x256xi1>
    %249 = vector.broadcast %cst_88 : f32 to vector<8x256xf32>
    %250 = arith.select %248, %246, %249 : vector<8x256xi1>, vector<8x256xf32>
    %c208_i32_89 = arith.constant 208 : i32
    %251 = tpu.dynamic_rotate %225 by %c208_i32_89 dim 1 : vector<8x256xf32>, i32 -> vector<8x256xf32>
    %cst_90 = arith.constant 0.000000e+00 : f32
    %252 = vector.shape_cast %110 : vector<1x256xi1> to vector<1x256xi1>
    %253 = vector.broadcast %252 : vector<1x256xi1> to vector<8x256xi1>
    %254 = vector.broadcast %cst_90 : f32 to vector<8x256xf32>
    %255 = arith.select %253, %251, %254 : vector<8x256xi1>, vector<8x256xf32>
    %256 = tpu.concatenate %230, %235, %240, %225, %245, %250, %255 in 0 : vector<8x256xf32>, vector<8x256xf32>, vector<8x256xf32>, vector<8x256xf32>, vector<8x256xf32>, vector<8x256xf32>, vector<8x256xf32> -> vector<56x256xf32>
    %c0_91 = arith.constant 0 : index
    %c0_92 = arith.constant 0 : index
    %257 = vector.load %arg7[%c0_91, %c0_92] : memref<8x56xbf16, #tpu.memory_space<vmem>>, vector<8x56xbf16>
    %258 = arith.truncf %256 : vector<56x256xf32> to vector<56x256xbf16>
    %cst_93 = arith.constant dense<0.000000e+00> : vector<8x256xf32>
    %259 = tpu.matmul %257, %258, %cst_93 {dimension_numbers = #tpu.dot_dimension_numbers<[1], [0], [0], [1], [0, 0, 1, 1], [], []>} : vector<8x56xbf16>, vector<56x256xbf16>, vector<8x256xf32> -> vector<8x256xf32>
    %c0_94 = arith.constant 0 : index
    %c0_95 = arith.constant 0 : index
    %260 = vector.load %arg8[%c0_94, %c0_95] : memref<8x1xf32, #tpu.memory_space<vmem>>, vector<8x1xf32>
    %261 = vector.broadcast %260 : vector<8x1xf32> to vector<8x256xf32>
    %262 = arith.addf %259, %261 : vector<8x256xf32>
    %c0_96 = arith.constant 0 : index
    %c0_97 = arith.constant 0 : index
    %263 = vector.load %arg9[%c0_96, %c0_97] : memref<8x1xf32, #tpu.memory_space<vmem>>, vector<8x1xf32>
    %cst_98 = arith.constant 0.000000e+00 : f32
    %264 = vector.shape_cast %111 : vector<1x256xi1> to vector<1x256xi1>
    %265 = vector.broadcast %264 : vector<1x256xi1> to vector<8x256xi1>
    %266 = vector.shape_cast %263 : vector<8x1xf32> to vector<8x1xf32>
    %267 = vector.broadcast %266 : vector<8x1xf32> to vector<8x256xf32>
    %268 = vector.broadcast %cst_98 : f32 to vector<8x256xf32>
    %269 = arith.select %265, %267, %268 : vector<8x256xi1>, vector<8x256xf32>
    %270 = arith.addf %262, %269 : vector<8x256xf32>
    %271 = arith.addf %187, %270 : vector<8x256xf32>
    %cst_99 = arith.constant dense<0.000000e+00> : vector<8xf32>
    %272 = vector.multi_reduction <add>, %271, %cst_99 [1] : vector<8x256xf32> to vector<8xf32>
    %273 = vector.shape_cast %272 : vector<8xf32> to vector<8x1xf32>
    %cst_100 = arith.constant 3.906250e-03 : f32
    %274 = vector.broadcast %cst_100 : f32 to vector<8x1xf32>
    %275 = arith.mulf %273, %274 : vector<8x1xf32>
    %276 = vector.broadcast %275 : vector<8x1xf32> to vector<8x256xf32>
    %277 = arith.subf %271, %276 : vector<8x256xf32>
    %278 = arith.mulf %277, %277 : vector<8x256xf32>
    %cst_101 = arith.constant dense<0.000000e+00> : vector<8xf32>
    %279 = vector.multi_reduction <add>, %278, %cst_101 [1] : vector<8x256xf32> to vector<8xf32>
    %280 = vector.shape_cast %279 : vector<8xf32> to vector<8x1xf32>
    %cst_102 = arith.constant 3.906250e-03 : f32
    %281 = vector.broadcast %cst_102 : f32 to vector<8x1xf32>
    %282 = arith.mulf %280, %281 : vector<8x1xf32>
    %cst_103 = arith.constant 9.99999974E-6 : f32
    %283 = vector.broadcast %cst_103 : f32 to vector<8x1xf32>
    %284 = arith.addf %282, %283 : vector<8x1xf32>
    %285 = math.rsqrt %284 : vector<8x1xf32>
    %286 = vector.broadcast %285 : vector<8x1xf32> to vector<8x256xf32>
    %287 = arith.mulf %277, %286 : vector<8x256xf32>
    %cst_104 = arith.constant 2.000000e-01 : f32
    %288 = vector.broadcast %cst_104 : f32 to vector<8x256xf32>
    %289 = arith.mulf %288, %287 : vector<8x256xf32>
    %290 = arith.maximumf %287, %289 : vector<8x256xf32>
    %c48_i32_105 = arith.constant 48 : i32
    %291 = tpu.dynamic_rotate %290 by %c48_i32_105 dim 1 : vector<8x256xf32>, i32 -> vector<8x256xf32>
    %cst_106 = arith.constant 0.000000e+00 : f32
    %292 = vector.shape_cast %65 : vector<1x256xi1> to vector<1x256xi1>
    %293 = vector.broadcast %292 : vector<1x256xi1> to vector<8x256xi1>
    %294 = vector.broadcast %cst_106 : f32 to vector<8x256xf32>
    %295 = arith.select %293, %291, %294 : vector<8x256xi1>, vector<8x256xf32>
    %c32_i32_107 = arith.constant 32 : i32
    %296 = tpu.dynamic_rotate %290 by %c32_i32_107 dim 1 : vector<8x256xf32>, i32 -> vector<8x256xf32>
    %cst_108 = arith.constant 0.000000e+00 : f32
    %297 = vector.shape_cast %74 : vector<1x256xi1> to vector<1x256xi1>
    %298 = vector.broadcast %297 : vector<1x256xi1> to vector<8x256xi1>
    %299 = vector.broadcast %cst_108 : f32 to vector<8x256xf32>
    %300 = arith.select %298, %296, %299 : vector<8x256xi1>, vector<8x256xf32>
    %c16_i32_109 = arith.constant 16 : i32
    %301 = tpu.dynamic_rotate %290 by %c16_i32_109 dim 1 : vector<8x256xf32>, i32 -> vector<8x256xf32>
    %cst_110 = arith.constant 0.000000e+00 : f32
    %302 = vector.shape_cast %83 : vector<1x256xi1> to vector<1x256xi1>
    %303 = vector.broadcast %302 : vector<1x256xi1> to vector<8x256xi1>
    %304 = vector.broadcast %cst_110 : f32 to vector<8x256xf32>
    %305 = arith.select %303, %301, %304 : vector<8x256xi1>, vector<8x256xf32>
    %c240_i32_111 = arith.constant 240 : i32
    %306 = tpu.dynamic_rotate %290 by %c240_i32_111 dim 1 : vector<8x256xf32>, i32 -> vector<8x256xf32>
    %cst_112 = arith.constant 0.000000e+00 : f32
    %307 = vector.shape_cast %92 : vector<1x256xi1> to vector<1x256xi1>
    %308 = vector.broadcast %307 : vector<1x256xi1> to vector<8x256xi1>
    %309 = vector.broadcast %cst_112 : f32 to vector<8x256xf32>
    %310 = arith.select %308, %306, %309 : vector<8x256xi1>, vector<8x256xf32>
    %c224_i32_113 = arith.constant 224 : i32
    %311 = tpu.dynamic_rotate %290 by %c224_i32_113 dim 1 : vector<8x256xf32>, i32 -> vector<8x256xf32>
    %cst_114 = arith.constant 0.000000e+00 : f32
    %312 = vector.shape_cast %101 : vector<1x256xi1> to vector<1x256xi1>
    %313 = vector.broadcast %312 : vector<1x256xi1> to vector<8x256xi1>
    %314 = vector.broadcast %cst_114 : f32 to vector<8x256xf32>
    %315 = arith.select %313, %311, %314 : vector<8x256xi1>, vector<8x256xf32>
    %c208_i32_115 = arith.constant 208 : i32
    %316 = tpu.dynamic_rotate %290 by %c208_i32_115 dim 1 : vector<8x256xf32>, i32 -> vector<8x256xf32>
    %cst_116 = arith.constant 0.000000e+00 : f32
    %317 = vector.shape_cast %110 : vector<1x256xi1> to vector<1x256xi1>
    %318 = vector.broadcast %317 : vector<1x256xi1> to vector<8x256xi1>
    %319 = vector.broadcast %cst_116 : f32 to vector<8x256xf32>
    %320 = arith.select %318, %316, %319 : vector<8x256xi1>, vector<8x256xf32>
    %321 = tpu.concatenate %295, %300, %305, %290, %310, %315, %320 in 0 : vector<8x256xf32>, vector<8x256xf32>, vector<8x256xf32>, vector<8x256xf32>, vector<8x256xf32>, vector<8x256xf32>, vector<8x256xf32> -> vector<56x256xf32>
    %c0_117 = arith.constant 0 : index
    %c0_118 = arith.constant 0 : index
    %322 = vector.load %arg10[%c0_117, %c0_118] : memref<8x56xbf16, #tpu.memory_space<vmem>>, vector<8x56xbf16>
    %323 = arith.truncf %321 : vector<56x256xf32> to vector<56x256xbf16>
    %cst_119 = arith.constant dense<0.000000e+00> : vector<8x256xf32>
    %324 = tpu.matmul %322, %323, %cst_119 {dimension_numbers = #tpu.dot_dimension_numbers<[1], [0], [0], [1], [0, 0, 1, 1], [], []>} : vector<8x56xbf16>, vector<56x256xbf16>, vector<8x256xf32> -> vector<8x256xf32>
    %c0_120 = arith.constant 0 : index
    %c0_121 = arith.constant 0 : index
    %325 = vector.load %arg11[%c0_120, %c0_121] : memref<8x1xf32, #tpu.memory_space<vmem>>, vector<8x1xf32>
    %326 = vector.broadcast %325 : vector<8x1xf32> to vector<8x256xf32>
    %327 = arith.addf %324, %326 : vector<8x256xf32>
    %c3_i32_122 = arith.constant 3 : i32
    %328 = tpu.dynamic_rotate %327 by %c3_i32_122 dim 1 : vector<8x256xf32>, i32 -> vector<8x256xf32>
    %cst_123 = arith.constant 0.000000e+00 : f32
    %329 = vector.shape_cast %11 : vector<1x256xi1> to vector<1x256xi1>
    %330 = vector.broadcast %329 : vector<1x256xi1> to vector<8x256xi1>
    %331 = vector.broadcast %cst_123 : f32 to vector<8x256xf32>
    %332 = arith.select %330, %328, %331 : vector<8x256xi1>, vector<8x256xf32>
    %c2_i32_124 = arith.constant 2 : i32
    %333 = tpu.dynamic_rotate %327 by %c2_i32_124 dim 1 : vector<8x256xf32>, i32 -> vector<8x256xf32>
    %cst_125 = arith.constant 0.000000e+00 : f32
    %334 = vector.shape_cast %20 : vector<1x256xi1> to vector<1x256xi1>
    %335 = vector.broadcast %334 : vector<1x256xi1> to vector<8x256xi1>
    %336 = vector.broadcast %cst_125 : f32 to vector<8x256xf32>
    %337 = arith.select %335, %333, %336 : vector<8x256xi1>, vector<8x256xf32>
    %c1_i32_126 = arith.constant 1 : i32
    %338 = tpu.dynamic_rotate %327 by %c1_i32_126 dim 1 : vector<8x256xf32>, i32 -> vector<8x256xf32>
    %cst_127 = arith.constant 0.000000e+00 : f32
    %339 = vector.shape_cast %29 : vector<1x256xi1> to vector<1x256xi1>
    %340 = vector.broadcast %339 : vector<1x256xi1> to vector<8x256xi1>
    %341 = vector.broadcast %cst_127 : f32 to vector<8x256xf32>
    %342 = arith.select %340, %338, %341 : vector<8x256xi1>, vector<8x256xf32>
    %c255_i32_128 = arith.constant 255 : i32
    %343 = tpu.dynamic_rotate %327 by %c255_i32_128 dim 1 : vector<8x256xf32>, i32 -> vector<8x256xf32>
    %cst_129 = arith.constant 0.000000e+00 : f32
    %344 = vector.shape_cast %38 : vector<1x256xi1> to vector<1x256xi1>
    %345 = vector.broadcast %344 : vector<1x256xi1> to vector<8x256xi1>
    %346 = vector.broadcast %cst_129 : f32 to vector<8x256xf32>
    %347 = arith.select %345, %343, %346 : vector<8x256xi1>, vector<8x256xf32>
    %c254_i32_130 = arith.constant 254 : i32
    %348 = tpu.dynamic_rotate %327 by %c254_i32_130 dim 1 : vector<8x256xf32>, i32 -> vector<8x256xf32>
    %cst_131 = arith.constant 0.000000e+00 : f32
    %349 = vector.shape_cast %47 : vector<1x256xi1> to vector<1x256xi1>
    %350 = vector.broadcast %349 : vector<1x256xi1> to vector<8x256xi1>
    %351 = vector.broadcast %cst_131 : f32 to vector<8x256xf32>
    %352 = arith.select %350, %348, %351 : vector<8x256xi1>, vector<8x256xf32>
    %c253_i32_132 = arith.constant 253 : i32
    %353 = tpu.dynamic_rotate %327 by %c253_i32_132 dim 1 : vector<8x256xf32>, i32 -> vector<8x256xf32>
    %cst_133 = arith.constant 0.000000e+00 : f32
    %354 = vector.shape_cast %56 : vector<1x256xi1> to vector<1x256xi1>
    %355 = vector.broadcast %354 : vector<1x256xi1> to vector<8x256xi1>
    %356 = vector.broadcast %cst_133 : f32 to vector<8x256xf32>
    %357 = arith.select %355, %353, %356 : vector<8x256xi1>, vector<8x256xf32>
    %358 = tpu.concatenate %332, %337, %342, %327, %347, %352, %357 in 0 : vector<8x256xf32>, vector<8x256xf32>, vector<8x256xf32>, vector<8x256xf32>, vector<8x256xf32>, vector<8x256xf32>, vector<8x256xf32> -> vector<56x256xf32>
    %c0_134 = arith.constant 0 : index
    %c0_135 = arith.constant 0 : index
    %359 = vector.load %arg12[%c0_134, %c0_135] : memref<8x56xbf16, #tpu.memory_space<vmem>>, vector<8x56xbf16>
    %360 = arith.truncf %358 : vector<56x256xf32> to vector<56x256xbf16>
    %cst_136 = arith.constant dense<0.000000e+00> : vector<8x256xf32>
    %361 = tpu.matmul %359, %360, %cst_136 {dimension_numbers = #tpu.dot_dimension_numbers<[1], [0], [0], [1], [0, 0, 1, 1], [], []>} : vector<8x56xbf16>, vector<56x256xbf16>, vector<8x256xf32> -> vector<8x256xf32>
    %c0_137 = arith.constant 0 : index
    %c0_138 = arith.constant 0 : index
    %362 = vector.load %arg13[%c0_137, %c0_138] : memref<8x1xf32, #tpu.memory_space<vmem>>, vector<8x1xf32>
    %363 = vector.broadcast %362 : vector<8x1xf32> to vector<8x256xf32>
    %364 = arith.addf %361, %363 : vector<8x256xf32>
    %c3_i32_139 = arith.constant 3 : i32
    %365 = tpu.dynamic_rotate %290 by %c3_i32_139 dim 1 : vector<8x256xf32>, i32 -> vector<8x256xf32>
    %cst_140 = arith.constant 0.000000e+00 : f32
    %366 = vector.shape_cast %11 : vector<1x256xi1> to vector<1x256xi1>
    %367 = vector.broadcast %366 : vector<1x256xi1> to vector<8x256xi1>
    %368 = vector.broadcast %cst_140 : f32 to vector<8x256xf32>
    %369 = arith.select %367, %365, %368 : vector<8x256xi1>, vector<8x256xf32>
    %c2_i32_141 = arith.constant 2 : i32
    %370 = tpu.dynamic_rotate %290 by %c2_i32_141 dim 1 : vector<8x256xf32>, i32 -> vector<8x256xf32>
    %cst_142 = arith.constant 0.000000e+00 : f32
    %371 = vector.shape_cast %20 : vector<1x256xi1> to vector<1x256xi1>
    %372 = vector.broadcast %371 : vector<1x256xi1> to vector<8x256xi1>
    %373 = vector.broadcast %cst_142 : f32 to vector<8x256xf32>
    %374 = arith.select %372, %370, %373 : vector<8x256xi1>, vector<8x256xf32>
    %c1_i32_143 = arith.constant 1 : i32
    %375 = tpu.dynamic_rotate %290 by %c1_i32_143 dim 1 : vector<8x256xf32>, i32 -> vector<8x256xf32>
    %cst_144 = arith.constant 0.000000e+00 : f32
    %376 = vector.shape_cast %29 : vector<1x256xi1> to vector<1x256xi1>
    %377 = vector.broadcast %376 : vector<1x256xi1> to vector<8x256xi1>
    %378 = vector.broadcast %cst_144 : f32 to vector<8x256xf32>
    %379 = arith.select %377, %375, %378 : vector<8x256xi1>, vector<8x256xf32>
    %c255_i32_145 = arith.constant 255 : i32
    %380 = tpu.dynamic_rotate %290 by %c255_i32_145 dim 1 : vector<8x256xf32>, i32 -> vector<8x256xf32>
    %cst_146 = arith.constant 0.000000e+00 : f32
    %381 = vector.shape_cast %38 : vector<1x256xi1> to vector<1x256xi1>
    %382 = vector.broadcast %381 : vector<1x256xi1> to vector<8x256xi1>
    %383 = vector.broadcast %cst_146 : f32 to vector<8x256xf32>
    %384 = arith.select %382, %380, %383 : vector<8x256xi1>, vector<8x256xf32>
    %c254_i32_147 = arith.constant 254 : i32
    %385 = tpu.dynamic_rotate %290 by %c254_i32_147 dim 1 : vector<8x256xf32>, i32 -> vector<8x256xf32>
    %cst_148 = arith.constant 0.000000e+00 : f32
    %386 = vector.shape_cast %47 : vector<1x256xi1> to vector<1x256xi1>
    %387 = vector.broadcast %386 : vector<1x256xi1> to vector<8x256xi1>
    %388 = vector.broadcast %cst_148 : f32 to vector<8x256xf32>
    %389 = arith.select %387, %385, %388 : vector<8x256xi1>, vector<8x256xf32>
    %c253_i32_149 = arith.constant 253 : i32
    %390 = tpu.dynamic_rotate %290 by %c253_i32_149 dim 1 : vector<8x256xf32>, i32 -> vector<8x256xf32>
    %cst_150 = arith.constant 0.000000e+00 : f32
    %391 = vector.shape_cast %56 : vector<1x256xi1> to vector<1x256xi1>
    %392 = vector.broadcast %391 : vector<1x256xi1> to vector<8x256xi1>
    %393 = vector.broadcast %cst_150 : f32 to vector<8x256xf32>
    %394 = arith.select %392, %390, %393 : vector<8x256xi1>, vector<8x256xf32>
    %395 = tpu.concatenate %369, %374, %379, %290, %384, %389, %394 in 0 : vector<8x256xf32>, vector<8x256xf32>, vector<8x256xf32>, vector<8x256xf32>, vector<8x256xf32>, vector<8x256xf32>, vector<8x256xf32> -> vector<56x256xf32>
    %c0_151 = arith.constant 0 : index
    %c0_152 = arith.constant 0 : index
    %396 = vector.load %arg14[%c0_151, %c0_152] : memref<8x56xbf16, #tpu.memory_space<vmem>>, vector<8x56xbf16>
    %397 = arith.truncf %395 : vector<56x256xf32> to vector<56x256xbf16>
    %cst_153 = arith.constant dense<0.000000e+00> : vector<8x256xf32>
    %398 = tpu.matmul %396, %397, %cst_153 {dimension_numbers = #tpu.dot_dimension_numbers<[1], [0], [0], [1], [0, 0, 1, 1], [], []>} : vector<8x56xbf16>, vector<56x256xbf16>, vector<8x256xf32> -> vector<8x256xf32>
    %cst_154 = arith.constant 0.000000e+00 : f32
    %399 = vector.shape_cast %111 : vector<1x256xi1> to vector<1x256xi1>
    %400 = vector.broadcast %399 : vector<1x256xi1> to vector<8x256xi1>
    %401 = vector.broadcast %cst_154 : f32 to vector<8x256xf32>
    %402 = arith.select %400, %398, %401 : vector<8x256xi1>, vector<8x256xf32>
    %c48_i32_155 = arith.constant 48 : i32
    %403 = tpu.dynamic_rotate %402 by %c48_i32_155 dim 1 : vector<8x256xf32>, i32 -> vector<8x256xf32>
    %cst_156 = arith.constant 0.000000e+00 : f32
    %404 = vector.shape_cast %65 : vector<1x256xi1> to vector<1x256xi1>
    %405 = vector.broadcast %404 : vector<1x256xi1> to vector<8x256xi1>
    %406 = vector.broadcast %cst_156 : f32 to vector<8x256xf32>
    %407 = arith.select %405, %403, %406 : vector<8x256xi1>, vector<8x256xf32>
    %c32_i32_157 = arith.constant 32 : i32
    %408 = tpu.dynamic_rotate %402 by %c32_i32_157 dim 1 : vector<8x256xf32>, i32 -> vector<8x256xf32>
    %cst_158 = arith.constant 0.000000e+00 : f32
    %409 = vector.shape_cast %74 : vector<1x256xi1> to vector<1x256xi1>
    %410 = vector.broadcast %409 : vector<1x256xi1> to vector<8x256xi1>
    %411 = vector.broadcast %cst_158 : f32 to vector<8x256xf32>
    %412 = arith.select %410, %408, %411 : vector<8x256xi1>, vector<8x256xf32>
    %c16_i32_159 = arith.constant 16 : i32
    %413 = tpu.dynamic_rotate %402 by %c16_i32_159 dim 1 : vector<8x256xf32>, i32 -> vector<8x256xf32>
    %cst_160 = arith.constant 0.000000e+00 : f32
    %414 = vector.shape_cast %83 : vector<1x256xi1> to vector<1x256xi1>
    %415 = vector.broadcast %414 : vector<1x256xi1> to vector<8x256xi1>
    %416 = vector.broadcast %cst_160 : f32 to vector<8x256xf32>
    %417 = arith.select %415, %413, %416 : vector<8x256xi1>, vector<8x256xf32>
    %c240_i32_161 = arith.constant 240 : i32
    %418 = tpu.dynamic_rotate %402 by %c240_i32_161 dim 1 : vector<8x256xf32>, i32 -> vector<8x256xf32>
    %cst_162 = arith.constant 0.000000e+00 : f32
    %419 = vector.shape_cast %92 : vector<1x256xi1> to vector<1x256xi1>
    %420 = vector.broadcast %419 : vector<1x256xi1> to vector<8x256xi1>
    %421 = vector.broadcast %cst_162 : f32 to vector<8x256xf32>
    %422 = arith.select %420, %418, %421 : vector<8x256xi1>, vector<8x256xf32>
    %c224_i32_163 = arith.constant 224 : i32
    %423 = tpu.dynamic_rotate %402 by %c224_i32_163 dim 1 : vector<8x256xf32>, i32 -> vector<8x256xf32>
    %cst_164 = arith.constant 0.000000e+00 : f32
    %424 = vector.shape_cast %101 : vector<1x256xi1> to vector<1x256xi1>
    %425 = vector.broadcast %424 : vector<1x256xi1> to vector<8x256xi1>
    %426 = vector.broadcast %cst_164 : f32 to vector<8x256xf32>
    %427 = arith.select %425, %423, %426 : vector<8x256xi1>, vector<8x256xf32>
    %c208_i32_165 = arith.constant 208 : i32
    %428 = tpu.dynamic_rotate %402 by %c208_i32_165 dim 1 : vector<8x256xf32>, i32 -> vector<8x256xf32>
    %cst_166 = arith.constant 0.000000e+00 : f32
    %429 = vector.shape_cast %110 : vector<1x256xi1> to vector<1x256xi1>
    %430 = vector.broadcast %429 : vector<1x256xi1> to vector<8x256xi1>
    %431 = vector.broadcast %cst_166 : f32 to vector<8x256xf32>
    %432 = arith.select %430, %428, %431 : vector<8x256xi1>, vector<8x256xf32>
    %433 = tpu.concatenate %407, %412, %417, %402, %422, %427, %432 in 0 : vector<8x256xf32>, vector<8x256xf32>, vector<8x256xf32>, vector<8x256xf32>, vector<8x256xf32>, vector<8x256xf32>, vector<8x256xf32> -> vector<56x256xf32>
    %c0_167 = arith.constant 0 : index
    %c0_168 = arith.constant 0 : index
    %434 = vector.load %arg15[%c0_167, %c0_168] : memref<8x56xbf16, #tpu.memory_space<vmem>>, vector<8x56xbf16>
    %435 = arith.truncf %433 : vector<56x256xf32> to vector<56x256xbf16>
    %cst_169 = arith.constant dense<0.000000e+00> : vector<8x256xf32>
    %436 = tpu.matmul %434, %435, %cst_169 {dimension_numbers = #tpu.dot_dimension_numbers<[1], [0], [0], [1], [0, 0, 1, 1], [], []>} : vector<8x56xbf16>, vector<56x256xbf16>, vector<8x256xf32> -> vector<8x256xf32>
    %c0_170 = arith.constant 0 : index
    %c0_171 = arith.constant 0 : index
    %437 = vector.load %arg16[%c0_170, %c0_171] : memref<8x1xf32, #tpu.memory_space<vmem>>, vector<8x1xf32>
    %438 = vector.broadcast %437 : vector<8x1xf32> to vector<8x256xf32>
    %439 = arith.addf %436, %438 : vector<8x256xf32>
    %c0_172 = arith.constant 0 : index
    %c0_173 = arith.constant 0 : index
    %440 = vector.load %arg17[%c0_172, %c0_173] : memref<8x1xf32, #tpu.memory_space<vmem>>, vector<8x1xf32>
    %cst_174 = arith.constant 0.000000e+00 : f32
    %441 = vector.shape_cast %111 : vector<1x256xi1> to vector<1x256xi1>
    %442 = vector.broadcast %441 : vector<1x256xi1> to vector<8x256xi1>
    %443 = vector.shape_cast %440 : vector<8x1xf32> to vector<8x1xf32>
    %444 = vector.broadcast %443 : vector<8x1xf32> to vector<8x256xf32>
    %445 = vector.broadcast %cst_174 : f32 to vector<8x256xf32>
    %446 = arith.select %442, %444, %445 : vector<8x256xi1>, vector<8x256xf32>
    %447 = arith.addf %439, %446 : vector<8x256xf32>
    %448 = arith.addf %364, %447 : vector<8x256xf32>
    %cst_175 = arith.constant dense<0.000000e+00> : vector<8xf32>
    %449 = vector.multi_reduction <add>, %448, %cst_175 [1] : vector<8x256xf32> to vector<8xf32>
    %450 = vector.shape_cast %449 : vector<8xf32> to vector<8x1xf32>
    %cst_176 = arith.constant 3.906250e-03 : f32
    %451 = vector.broadcast %cst_176 : f32 to vector<8x1xf32>
    %452 = arith.mulf %450, %451 : vector<8x1xf32>
    %453 = vector.broadcast %452 : vector<8x1xf32> to vector<8x256xf32>
    %454 = arith.subf %448, %453 : vector<8x256xf32>
    %455 = arith.mulf %454, %454 : vector<8x256xf32>
    %cst_177 = arith.constant dense<0.000000e+00> : vector<8xf32>
    %456 = vector.multi_reduction <add>, %455, %cst_177 [1] : vector<8x256xf32> to vector<8xf32>
    %457 = vector.shape_cast %456 : vector<8xf32> to vector<8x1xf32>
    %cst_178 = arith.constant 3.906250e-03 : f32
    %458 = vector.broadcast %cst_178 : f32 to vector<8x1xf32>
    %459 = arith.mulf %457, %458 : vector<8x1xf32>
    %cst_179 = arith.constant 9.99999974E-6 : f32
    %460 = vector.broadcast %cst_179 : f32 to vector<8x1xf32>
    %461 = arith.addf %459, %460 : vector<8x1xf32>
    %462 = math.rsqrt %461 : vector<8x1xf32>
    %463 = vector.broadcast %462 : vector<8x1xf32> to vector<8x256xf32>
    %464 = arith.mulf %454, %463 : vector<8x256xf32>
    %cst_180 = arith.constant 2.000000e-01 : f32
    %465 = vector.broadcast %cst_180 : f32 to vector<8x256xf32>
    %466 = arith.mulf %465, %464 : vector<8x256xf32>
    %467 = arith.maximumf %464, %466 : vector<8x256xf32>
    %c0_181 = arith.constant 0 : index
    %c0_182 = arith.constant 0 : index
    %c0_183 = arith.constant 0 : index
    %468 = vector.load %arg18[%c0_181, %c0_182, %c0_183] : memref<1x8x256xf32, #tpu.memory_space<vmem>>, vector<1x8x256xf32>
    %469 = vector.shape_cast %468 : vector<1x8x256xf32> to vector<8x256xf32>
    %470 = vector.shape_cast %467 : vector<8x256xf32> to vector<1x8x256xf32>
    tpu.vector_store %arg18[%c0_181, %c0_182, %c0_183], %470 {strides = array<i32>} : memref<1x8x256xf32, #tpu.memory_space<vmem>>, vector<1x8x256xf32>,
    return
  }
  func.func @transform_0(%arg0: i32) -> (i32, i32, i32) {
    %c0_i32 = arith.constant 0 : i32
    %c0_i32_0 = arith.constant 0 : i32
    %c0_i32_1 = arith.constant 0 : i32
    return %arg0, %c0_i32, %c0_i32_0 : i32, i32, i32
  }
  func.func @transform_1(%arg0: i32) -> (i32, i32) {
    %c0_i32 = arith.constant 0 : i32
    %c0_i32_0 = arith.constant 0 : i32
    %c0_i32_1 = arith.constant 0 : i32
    return %c0_i32, %c0_i32_0 : i32, i32
  }
  func.func @transform_2(%arg0: i32) -> (i32, i32) {
    %c0_i32 = arith.constant 0 : i32
    %c0_i32_0 = arith.constant 0 : i32
    %c0_i32_1 = arith.constant 0 : i32
    return %c0_i32, %c0_i32_0 : i32, i32
  }
  func.func @transform_3(%arg0: i32) -> (i32, i32) {
    %c0_i32 = arith.constant 0 : i32
    %c0_i32_0 = arith.constant 0 : i32
    %c0_i32_1 = arith.constant 0 : i32
    return %c0_i32, %c0_i32_0 : i32, i32
  }
  func.func @transform_4(%arg0: i32) -> (i32, i32) {
    %c0_i32 = arith.constant 0 : i32
    %c0_i32_0 = arith.constant 0 : i32
    %c0_i32_1 = arith.constant 0 : i32
    return %c0_i32, %c0_i32_0 : i32, i32
  }
  func.func @transform_5(%arg0: i32) -> (i32, i32) {
    %c0_i32 = arith.constant 0 : i32
    %c0_i32_0 = arith.constant 0 : i32
    %c0_i32_1 = arith.constant 0 : i32
    return %c0_i32, %c0_i32_0 : i32, i32
  }
  func.func @transform_6(%arg0: i32) -> (i32, i32) {
    %c0_i32 = arith.constant 0 : i32
    %c0_i32_0 = arith.constant 0 : i32
    %c0_i32_1 = arith.constant 0 : i32
    return %c0_i32, %c0_i32_0 : i32, i32
  }
  func.func @transform_7(%arg0: i32) -> (i32, i32) {
    %c0_i32 = arith.constant 0 : i32
    %c0_i32_0 = arith.constant 0 : i32
    %c0_i32_1 = arith.constant 0 : i32
    return %c0_i32, %c0_i32_0 : i32, i32
  }
  func.func @transform_8(%arg0: i32) -> (i32, i32) {
    %c0_i32 = arith.constant 0 : i32
    %c0_i32_0 = arith.constant 0 : i32
    %c0_i32_1 = arith.constant 0 : i32
    return %c0_i32, %c0_i32_0 : i32, i32
  }
  func.func @transform_9(%arg0: i32) -> (i32, i32) {
    %c0_i32 = arith.constant 0 : i32
    %c0_i32_0 = arith.constant 0 : i32
    %c0_i32_1 = arith.constant 0 : i32
    return %c0_i32, %c0_i32_0 : i32, i32
  }
  func.func @transform_10(%arg0: i32) -> (i32, i32) {
    %c0_i32 = arith.constant 0 : i32
    %c0_i32_0 = arith.constant 0 : i32
    %c0_i32_1 = arith.constant 0 : i32
    return %c0_i32, %c0_i32_0 : i32, i32
  }
  func.func @transform_11(%arg0: i32) -> (i32, i32) {
    %c0_i32 = arith.constant 0 : i32
    %c0_i32_0 = arith.constant 0 : i32
    %c0_i32_1 = arith.constant 0 : i32
    return %c0_i32, %c0_i32_0 : i32, i32
  }
  func.func @transform_12(%arg0: i32) -> (i32, i32) {
    %c0_i32 = arith.constant 0 : i32
    %c0_i32_0 = arith.constant 0 : i32
    %c0_i32_1 = arith.constant 0 : i32
    return %c0_i32, %c0_i32_0 : i32, i32
  }
  func.func @transform_13(%arg0: i32) -> (i32, i32) {
    %c0_i32 = arith.constant 0 : i32
    %c0_i32_0 = arith.constant 0 : i32
    %c0_i32_1 = arith.constant 0 : i32
    return %c0_i32, %c0_i32_0 : i32, i32
  }
  func.func @transform_14(%arg0: i32) -> (i32, i32) {
    %c0_i32 = arith.constant 0 : i32
    %c0_i32_0 = arith.constant 0 : i32
    %c0_i32_1 = arith.constant 0 : i32
    return %c0_i32, %c0_i32_0 : i32, i32
  }
  func.func @transform_15(%arg0: i32) -> (i32, i32) {
    %c0_i32 = arith.constant 0 : i32
    %c0_i32_0 = arith.constant 0 : i32
    %c0_i32_1 = arith.constant 0 : i32
    return %c0_i32, %c0_i32_0 : i32, i32
  }
  func.func @transform_16(%arg0: i32) -> (i32, i32) {
    %c0_i32 = arith.constant 0 : i32
    %c0_i32_0 = arith.constant 0 : i32
    %c0_i32_1 = arith.constant 0 : i32
    return %c0_i32, %c0_i32_0 : i32, i32
  }
  func.func @transform_17(%arg0: i32) -> (i32, i32, i32) {
    %c0_i32 = arith.constant 0 : i32
    %c0_i32_0 = arith.constant 0 : i32
    %c0_i32_1 = arith.constant 0 : i32
    return %arg0, %c0_i32, %c0_i32_0 : i32, i32, i32
  }
}

</mosaic_0001>

<llo_original>
// kernel: gcn_unet_block_down_forward.1
$region0: #{gcn_unet_block_down_forward.1}
  #allocation0 [shape = 'u32[]', space=smem, size = 0x4, offset = 0x4, fixed_abs, tag = 'smem constant byte address 0x4 - core index']
  #allocation1 [shape = 'u32[144,128]{1,0:T(1,128)}', space=vmem, size = 0x12000, scoped, tag = 'internal scratch']
  %s0 = inlined_call_operand.vmem [shape: f32[2,8,256], index: 0, kind: input, shape index: {}]
  %s1 = inlined_call_operand.vmem [shape: bf16[8,56], index: 1, kind: input, shape index: {}]
  %s2 = inlined_call_operand.vmem [shape: f32[8,1], index: 2, kind: input, shape index: {}]
  %s3 = inlined_call_operand.vmem [shape: bf16[8,56], index: 3, kind: input, shape index: {}]
  %s4 = inlined_call_operand.vmem [shape: f32[8,1], index: 4, kind: input, shape index: {}]
  %s5 = inlined_call_operand.vmem [shape: bf16[8,56], index: 5, kind: input, shape index: {}]
  %s6 = inlined_call_operand.vmem [shape: bf16[8,56], index: 6, kind: input, shape index: {}]
  %s7 = inlined_call_operand.vmem [shape: f32[8,1], index: 7, kind: input, shape index: {}]
  %s8 = inlined_call_operand.vmem [shape: f32[8,1], index: 8, kind: input, shape index: {}]
  %s9 = inlined_call_operand.vmem [shape: bf16[8,56], index: 9, kind: input, shape index: {}]
  %s10 = inlined_call_operand.vmem [shape: f32[8,1], index: 10, kind: input, shape index: {}]
  %s11 = inlined_call_operand.vmem [shape: bf16[8,56], index: 11, kind: input, shape index: {}]
  %s12 = inlined_call_operand.vmem [shape: f32[8,1], index: 12, kind: input, shape index: {}]
  %s13 = inlined_call_operand.vmem [shape: bf16[8,56], index: 13, kind: input, shape index: {}]
  %s14 = inlined_call_operand.vmem [shape: bf16[8,56], index: 14, kind: input, shape index: {}]
  %s15 = inlined_call_operand.vmem [shape: f32[8,1], index: 15, kind: input, shape index: {}]
  %s16 = inlined_call_operand.vmem [shape: f32[8,1], index: 16, kind: input, shape index: {}]
  %s17 = inlined_call_operand.vmem [shape: f32[2,8,256], index: 17, kind: output, shape index: {}]
  %s18 = sld [smem:[#allocation0]]
  $region101: #{gcn_unet_block_down_forward.1} parent=0
    _
  %s20 = ssub.s32 1, %s18
  %s21 = scalar_select 0, %s20, %s18
  loop: start=0, step=1, limit=4
  $region2: #{gcn_unet_block_down_forward.1} parent=0 // loop_pre_header
    _
  $region3: #{gcn_unet_block_down_forward.1} parent=0 // loop_header
    %s23 = sphi 0, %s27
    %p24 = scmp.ge.s32.totalorder %s23, 4
    %s33 = sphi 0, %s35
    %s36 = sphi 0, %s33
    %s37 = sphi 0, %s36
    %s53 = sphi 0, %s37
    %s57 = sphi 0, %s57
    %s59 = sphi 0, %s57
    %s60 = sphi 0, %s59
    %s74 = sphi 0, %s60
    %s78 = sphi 0, %s78
    %s80 = sphi 0, %s78
    %s81 = sphi 0, %s80
    %s95 = sphi 0, %s81
    %s99 = sphi 0, %s99
    %s101 = sphi 0, %s99
    %s102 = sphi 0, %s101
    %s116 = sphi 0, %s102
    %s120 = sphi 0, %s120
    %s122 = sphi 0, %s120
    %s123 = sphi 0, %s122
    %s137 = sphi 0, %s123
    %s141 = sphi 0, %s141
    %s143 = sphi 0, %s141
    %s144 = sphi 0, %s143
    %s158 = sphi 0, %s144
    %s162 = sphi 0, %s162
    %s164 = sphi 0, %s162
    %s165 = sphi 0, %s164
    %s179 = sphi 0, %s165
    %s183 = sphi 0, %s183
    %s185 = sphi 0, %s183
    %s186 = sphi 0, %s185
    %s200 = sphi 0, %s186
    %s204 = sphi 0, %s204
    %s206 = sphi 0, %s204
    %s207 = sphi 0, %s206
    %s221 = sphi 0, %s207
    %s225 = sphi 0, %s225
    %s227 = sphi 0, %s225
    %s228 = sphi 0, %s227
    %s242 = sphi 0, %s228
    %s246 = sphi 0, %s246
    %s248 = sphi 0, %s246
    %s249 = sphi 0, %s248
    %s263 = sphi 0, %s249
    %s267 = sphi 0, %s267
    %s269 = sphi 0, %s267
    %s270 = sphi 0, %s269
    %s284 = sphi 0, %s270
    %s288 = sphi 0, %s288
    %s290 = sphi 0, %s288
    %s291 = sphi 0, %s290
    %s305 = sphi 0, %s291
    %s309 = sphi 0, %s309
    %s311 = sphi 0, %s309
    %s312 = sphi 0, %s311
    %s326 = sphi 0, %s312
    %s330 = sphi 0, %s330
    %s332 = sphi 0, %s330
    %s333 = sphi 0, %s332
    %s347 = sphi 0, %s333
    %s351 = sphi 0, %s351
    %s353 = sphi 0, %s351
    %s354 = sphi 0, %s353
    %s368 = sphi 0, %s354
    %s372 = sphi 0, %s372
    %s374 = sphi 0, %s372
    %s375 = sphi 0, %s374
    %s389 = sphi 0, %s375
    %s395 = sphi 0, %s397
    %s398 = sphi 0, %s395
    %s399 = sphi 0, %s398
    %s415 = sphi 0, %s399
  $region4: #{gcn_unet_block_down_forward.1} parent=0 // loop_header_branch
    %26 = sbr.rel (%p24) target = $region8
  $region5: #{gcn_unet_block_down_forward.1} parent=0 // loop_body
    %s28 = ssub.s32 %s23, 1
    %s29 = ssub.s32 %s23, 2
    %s30 = sadd.s32 %s23, 1
    %s31 = ssub.s32 %s23, %s30
    %p32 = scmp.eq.s32.totalorder %s31, 0
    %s34 = sadd.s32 %s33, 1
    %s35 = scalar_select %p32, %s33, %s34
    %p38 = pneg %p32
    %p39 = scmp.eq.s32.totalorder %s23, 1
    %p40 = por %p38, %p39
    %p41 = scmp.ne.s32.totalorder %s33, %s36
    %p42 = scmp.eq.s32.totalorder %s23, 0
    %p43 = por %p41, %p42
    %p44 = scmp.ne.s32.totalorder %s33, %s36
    %p45 = scmp.eq.s32.totalorder %s28, 1
    %p46 = por %p44, %p45
    %p47 = scmp.ne.s32.totalorder %s36, %s37
    %p48 = scmp.eq.s32.totalorder %s28, 0
    %p49 = por %p47, %p48
    %p50 = scmp.ne.s32.totalorder %s36, %s37
    %p51 = scmp.eq.s32.totalorder %s29, 1
    %p52 = por %p50, %p51
    %p54 = scmp.ne.s32.totalorder %s37, %s53
    %p55 = scmp.eq.s32.totalorder %s29, 0
    %p56 = por %p54, %p55
    %s58 = sadd.s32 %s57, 1
    %p61 = scmp.eq.s32.totalorder %s23, 1
    %p62 = scmp.ne.s32.totalorder %s57, %s59
    %p63 = scmp.eq.s32.totalorder %s23, 0
    %p64 = por %p62, %p63
    %p65 = scmp.ne.s32.totalorder %s57, %s59
    %p66 = scmp.eq.s32.totalorder %s28, 1
    %p67 = por %p65, %p66
    %p68 = scmp.ne.s32.totalorder %s59, %s60
    %p69 = scmp.eq.s32.totalorder %s28, 0
    %p70 = por %p68, %p69
    %p71 = scmp.ne.s32.totalorder %s59, %s60
    %p72 = scmp.eq.s32.totalorder %s29, 1
    %p73 = por %p71, %p72
    %p75 = scmp.ne.s32.totalorder %s60, %s74
    %p76 = scmp.eq.s32.totalorder %s29, 0
    %p77 = por %p75, %p76
    %s79 = sadd.s32 %s78, 1
    %p82 = scmp.eq.s32.totalorder %s23, 1
    %p83 = scmp.ne.s32.totalorder %s78, %s80
    %p84 = scmp.eq.s32.totalorder %s23, 0
    %p85 = por %p83, %p84
    %p86 = scmp.ne.s32.totalorder %s78, %s80
    %p87 = scmp.eq.s32.totalorder %s28, 1
    %p88 = por %p86, %p87
    %p89 = scmp.ne.s32.totalorder %s80, %s81
    %p90 = scmp.eq.s32.totalorder %s28, 0
    %p91 = por %p89, %p90
    %p92 = scmp.ne.s32.totalorder %s80, %s81
    %p93 = scmp.eq.s32.totalorder %s29, 1
    %p94 = por %p92, %p93
    %p96 = scmp.ne.s32.totalorder %s81, %s95
    %p97 = scmp.eq.s32.totalorder %s29, 0
    %p98 = por %p96, %p97
    %s100 = sadd.s32 %s99, 1
    %p103 = scmp.eq.s32.totalorder %s23, 1
    %p104 = scmp.ne.s32.totalorder %s99, %s101
    %p105 = scmp.eq.s32.totalorder %s23, 0
    %p106 = por %p104, %p105
    %p107 = scmp.ne.s32.totalorder %s99, %s101
    %p108 = scmp.eq.s32.totalorder %s28, 1
    %p109 = por %p107, %p108
    %p110 = scmp.ne.s32.totalorder %s101, %s102
    %p111 = scmp.eq.s32.totalorder %s28, 0
    %p112 = por %p110, %p111
    %p113 = scmp.ne.s32.totalorder %s101, %s102
    %p114 = scmp.eq.s32.totalorder %s29, 1
    %p115 = por %p113, %p114
    %p117 = scmp.ne.s32.totalorder %s102, %s116
    %p118 = scmp.eq.s32.totalorder %s29, 0
    %p119 = por %p117, %p118
    %s121 = sadd.s32 %s120, 1
    %p124 = scmp.eq.s32.totalorder %s23, 1
    %p125 = scmp.ne.s32.totalorder %s120, %s122
    %p126 = scmp.eq.s32.totalorder %s23, 0
    %p127 = por %p125, %p126
    %p128 = scmp.ne.s32.totalorder %s120, %s122
    %p129 = scmp.eq.s32.totalorder %s28, 1
    %p130 = por %p128, %p129
    %p131 = scmp.ne.s32.totalorder %s122, %s123
    %p132 = scmp.eq.s32.totalorder %s28, 0
    %p133 = por %p131, %p132
    %p134 = scmp.ne.s32.totalorder %s122, %s123
    %p135 = scmp.eq.s32.totalorder %s29, 1
    %p136 = por %p134, %p135
    %p138 = scmp.ne.s32.totalorder %s123, %s137
    %p139 = scmp.eq.s32.totalorder %s29, 0
    %p140 = por %p138, %p139
    %s142 = sadd.s32 %s141, 1
    %p145 = scmp.eq.s32.totalorder %s23, 1
    %p146 = scmp.ne.s32.totalorder %s141, %s143
    %p147 = scmp.eq.s32.totalorder %s23, 0
    %p148 = por %p146, %p147
    %p149 = scmp.ne.s32.totalorder %s141, %s143
    %p150 = scmp.eq.s32.totalorder %s28, 1
    %p151 = por %p149, %p150
    %p152 = scmp.ne.s32.totalorder %s143, %s144
    %p153 = scmp.eq.s32.totalorder %s28, 0
    %p154 = por %p152, %p153
    %p155 = scmp.ne.s32.totalorder %s143, %s144
    %p156 = scmp.eq.s32.totalorder %s29, 1
    %p157 = por %p155, %p156
    %p159 = scmp.ne.s32.totalorder %s144, %s158
    %p160 = scmp.eq.s32.totalorder %s29, 0
    %p161 = por %p159, %p160
    %s163 = sadd.s32 %s162, 1
    %p166 = scmp.eq.s32.totalorder %s23, 1
    %p167 = scmp.ne.s32.totalorder %s162, %s164
    %p168 = scmp.eq.s32.totalorder %s23, 0
    %p169 = por %p167, %p168
    %p170 = scmp.ne.s32.totalorder %s162, %s164
    %p171 = scmp.eq.s32.totalorder %s28, 1
    %p172 = por %p170, %p171
    %p173 = scmp.ne.s32.totalorder %s164, %s165
    %p174 = scmp.eq.s32.totalorder %s28, 0
    %p175 = por %p173, %p174
    %p176 = scmp.ne.s32.totalorder %s164, %s165
    %p177 = scmp.eq.s32.totalorder %s29, 1
    %p178 = por %p176, %p177
    %p180 = scmp.ne.s32.totalorder %s165, %s179
    %p181 = scmp.eq.s32.totalorder %s29, 0
    %p182 = por %p180, %p181
    %s184 = sadd.s32 %s183, 1
    %p187 = scmp.eq.s32.totalorder %s23, 1
    %p188 = scmp.ne.s32.totalorder %s183, %s185
    %p189 = scmp.eq.s32.totalorder %s23, 0
    %p190 = por %p188, %p189
    %p191 = scmp.ne.s32.totalorder %s183, %s185
    %p192 = scmp.eq.s32.totalorder %s28, 1
    %p193 = por %p191, %p192
    %p194 = scmp.ne.s32.totalorder %s185, %s186
    %p195 = scmp.eq.s32.totalorder %s28, 0
    %p196 = por %p194, %p195
    %p197 = scmp.ne.s32.totalorder %s185, %s186
    %p198 = scmp.eq.s32.totalorder %s29, 1
    %p199 = por %p197, %p198
    %p201 = scmp.ne.s32.totalorder %s186, %s200
    %p202 = scmp.eq.s32.totalorder %s29, 0
    %p203 = por %p201, %p202
    %s205 = sadd.s32 %s204, 1
    %p208 = scmp.eq.s32.totalorder %s23, 1
    %p209 = scmp.ne.s32.totalorder %s204, %s206
    %p210 = scmp.eq.s32.totalorder %s23, 0
    %p211 = por %p209, %p210
    %p212 = scmp.ne.s32.totalorder %s204, %s206
    %p213 = scmp.eq.s32.totalorder %s28, 1
    %p214 = por %p212, %p213
    %p215 = scmp.ne.s32.totalorder %s206, %s207
    %p216 = scmp.eq.s32.totalorder %s28, 0
    %p217 = por %p215, %p216
    %p218 = scmp.ne.s32.totalorder %s206, %s207
    %p219 = scmp.eq.s32.totalorder %s29, 1
    %p220 = por %p218, %p219
    %p222 = scmp.ne.s32.totalorder %s207, %s221
    %p223 = scmp.eq.s32.totalorder %s29, 0
    %p224 = por %p222, %p223
    %s226 = sadd.s32 %s225, 1
    %p229 = scmp.eq.s32.totalorder %s23, 1
    %p230 = scmp.ne.s32.totalorder %s225, %s227
    %p231 = scmp.eq.s32.totalorder %s23, 0
    %p232 = por %p230, %p231
    %p233 = scmp.ne.s32.totalorder %s225, %s227
    %p234 = scmp.eq.s32.totalorder %s28, 1
    %p235 = por %p233, %p234
    %p236 = scmp.ne.s32.totalorder %s227, %s228
    %p237 = scmp.eq.s32.totalorder %s28, 0
    %p238 = por %p236, %p237
    %p239 = scmp.ne.s32.totalorder %s227, %s228
    %p240 = scmp.eq.s32.totalorder %s29, 1
    %p241 = por %p239, %p240
    %p243 = scmp.ne.s32.totalorder %s228, %s242
    %p244 = scmp.eq.s32.totalorder %s29, 0
    %p245 = por %p243, %p244
    %s247 = sadd.s32 %s246, 1
    %p250 = scmp.eq.s32.totalorder %s23, 1
    %p251 = scmp.ne.s32.totalorder %s246, %s248
    %p252 = scmp.eq.s32.totalorder %s23, 0
    %p253 = por %p251, %p252
    %p254 = scmp.ne.s32.totalorder %s246, %s248
    %p255 = scmp.eq.s32.totalorder %s28, 1
    %p256 = por %p254, %p255
    %p257 = scmp.ne.s32.totalorder %s248, %s249
    %p258 = scmp.eq.s32.totalorder %s28, 0
    %p259 = por %p257, %p258
    %p260 = scmp.ne.s32.totalorder %s248, %s249
    %p261 = scmp.eq.s32.totalorder %s29, 1
    %p262 = por %p260, %p261
    %p264 = scmp.ne.s32.totalorder %s249, %s263
    %p265 = scmp.eq.s32.totalorder %s29, 0
    %p266 = por %p264, %p265
    %s268 = sadd.s32 %s267, 1
    %p271 = scmp.eq.s32.totalorder %s23, 1
    %p272 = scmp.ne.s32.totalorder %s267, %s269
    %p273 = scmp.eq.s32.totalorder %s23, 0
    %p274 = por %p272, %p273
    %p275 = scmp.ne.s32.totalorder %s267, %s269
    %p276 = scmp.eq.s32.totalorder %s28, 1
    %p277 = por %p275, %p276
    %p278 = scmp.ne.s32.totalorder %s269, %s270
    %p279 = scmp.eq.s32.totalorder %s28, 0
    %p280 = por %p278, %p279
    %p281 = scmp.ne.s32.totalorder %s269, %s270
    %p282 = scmp.eq.s32.totalorder %s29, 1
    %p283 = por %p281, %p282
    %p285 = scmp.ne.s32.totalorder %s270, %s284
    %p286 = scmp.eq.s32.totalorder %s29, 0
    %p287 = por %p285, %p286
    %s289 = sadd.s32 %s288, 1
    %p292 = scmp.eq.s32.totalorder %s23, 1
    %p293 = scmp.ne.s32.totalorder %s288, %s290
    %p294 = scmp.eq.s32.totalorder %s23, 0
    %p295 = por %p293, %p294
    %p296 = scmp.ne.s32.totalorder %s288, %s290
    %p297 = scmp.eq.s32.totalorder %s28, 1
    %p298 = por %p296, %p297
    %p299 = scmp.ne.s32.totalorder %s290, %s291
    %p300 = scmp.eq.s32.totalorder %s28, 0
    %p301 = por %p299, %p300
    %p302 = scmp.ne.s32.totalorder %s290, %s291
    %p303 = scmp.eq.s32.totalorder %s29, 1
    %p304 = por %p302, %p303
    %p306 = scmp.ne.s32.totalorder %s291, %s305
    %p307 = scmp.eq.s32.totalorder %s29, 0
    %p308 = por %p306, %p307
    %s310 = sadd.s32 %s309, 1
    %p313 = scmp.eq.s32.totalorder %s23, 1
    %p314 = scmp.ne.s32.totalorder %s309, %s311
    %p315 = scmp.eq.s32.totalorder %s23, 0
    %p316 = por %p314, %p315
    %p317 = scmp.ne.s32.totalorder %s309, %s311
    %p318 = scmp.eq.s32.totalorder %s28, 1
    %p319 = por %p317, %p318
    %p320 = scmp.ne.s32.totalorder %s311, %s312
    %p321 = scmp.eq.s32.totalorder %s28, 0
    %p322 = por %p320, %p321
    %p323 = scmp.ne.s32.totalorder %s311, %s312
    %p324 = scmp.eq.s32.totalorder %s29, 1
    %p325 = por %p323, %p324
    %p327 = scmp.ne.s32.totalorder %s312, %s326
    %p328 = scmp.eq.s32.totalorder %s29, 0
    %p329 = por %p327, %p328
    %s331 = sadd.s32 %s330, 1
    %p334 = scmp.eq.s32.totalorder %s23, 1
    %p335 = scmp.ne.s32.totalorder %s330, %s332
    %p336 = scmp.eq.s32.totalorder %s23, 0
    %p337 = por %p335, %p336
    %p338 = scmp.ne.s32.totalorder %s330, %s332
    %p339 = scmp.eq.s32.totalorder %s28, 1
    %p340 = por %p338, %p339
    %p341 = scmp.ne.s32.totalorder %s332, %s333
    %p342 = scmp.eq.s32.totalorder %s28, 0
    %p343 = por %p341, %p342
    %p344 = scmp.ne.s32.totalorder %s332, %s333
    %p345 = scmp.eq.s32.totalorder %s29, 1
    %p346 = por %p344, %p345
    %p348 = scmp.ne.s32.totalorder %s333, %s347
    %p349 = scmp.eq.s32.totalorder %s29, 0
    %p350 = por %p348, %p349
    %s352 = sadd.s32 %s351, 1
    %p355 = scmp.eq.s32.totalorder %s23, 1
    %p356 = scmp.ne.s32.totalorder %s351, %s353
    %p357 = scmp.eq.s32.totalorder %s23, 0
    %p358 = por %p356, %p357
    %p359 = scmp.ne.s32.totalorder %s351, %s353
    %p360 = scmp.eq.s32.totalorder %s28, 1
    %p361 = por %p359, %p360
    %p362 = scmp.ne.s32.totalorder %s353, %s354
    %p363 = scmp.eq.s32.totalorder %s28, 0
    %p364 = por %p362, %p363
    %p365 = scmp.ne.s32.totalorder %s353, %s354
    %p366 = scmp.eq.s32.totalorder %s29, 1
    %p367 = por %p365, %p366
    %p369 = scmp.ne.s32.totalorder %s354, %s368
    %p370 = scmp.eq.s32.totalorder %s29, 0
    %p371 = por %p369, %p370
    %s373 = sadd.s32 %s372, 1
    %p376 = scmp.eq.s32.totalorder %s23, 1
    %p377 = scmp.ne.s32.totalorder %s372, %s374
    %p378 = scmp.eq.s32.totalorder %s23, 0
    %p379 = por %p377, %p378
    %p380 = scmp.ne.s32.totalorder %s372, %s374
    %p381 = scmp.eq.s32.totalorder %s28, 1
    %p382 = por %p380, %p381
    %p383 = scmp.ne.s32.totalorder %s374, %s375
    %p384 = scmp.eq.s32.totalorder %s28, 0
    %p385 = por %p383, %p384
    %p386 = scmp.ne.s32.totalorder %s374, %s375
    %p387 = scmp.eq.s32.totalorder %s29, 1
    %p388 = por %p386, %p387
    %p390 = scmp.ne.s32.totalorder %s375, %s389
    %p391 = scmp.eq.s32.totalorder %s29, 0
    %p392 = por %p390, %p391
    %s393 = ssub.s32 %s23, %s30
    %p394 = scmp.eq.s32.totalorder %s393, 0
    %s396 = sadd.s32 %s395, 1
    %s397 = scalar_select %p394, %s395, %s396
    %p400 = pneg %p394
    %p401 = scmp.eq.s32.totalorder %s23, 1
    %p402 = por %p400, %p401
    %p403 = scmp.ne.s32.totalorder %s395, %s398
    %p404 = scmp.eq.s32.totalorder %s23, 0
    %p405 = por %p403, %p404
    %p406 = scmp.ne.s32.totalorder %s395, %s398
    %p407 = scmp.eq.s32.totalorder %s28, 1
    %p408 = por %p406, %p407
    %p409 = scmp.ne.s32.totalorder %s398, %s399
    %p410 = scmp.eq.s32.totalorder %s28, 0
    %p411 = por %p409, %p410
    %p412 = scmp.ne.s32.totalorder %s398, %s399
    %p413 = scmp.eq.s32.totalorder %s29, 1
    %p414 = por %p412, %p413
    %p416 = scmp.ne.s32.totalorder %s399, %s415
    %p417 = scmp.eq.s32.totalorder %s29, 0
    %p418 = por %p416, %p417
    %p419 = scmp.le.s32.totalorder 1, %s23
    %p420 = scmp.lt.s32.totalorder %s23, 3
    %p421 = pnand %p419, %p420
    %p422 = pneg %p421
    // Predicated region
    $region9: #{gcn_unet_block_down_forward.1} parent=5 // pred_check
      _
    $region10: #{gcn_unet_block_down_forward.1} parent=5 // pred_check_branch
      %424 = sbr.rel (%p421) target = $region12
    $region11: #{gcn_unet_block_down_forward.1} parent=5 // pred_region
      %s425 = ssub.s32 %s23, 1
      // Predicated region
      $region13: #{gcn_unet_block_down_forward.1} parent=11 // pred_check
        %p426 = pneg %p70
      $region14: #{gcn_unet_block_down_forward.1} parent=11 // pred_check_branch
        %428 = sbr.rel (%p426) target = $region16
      $region15: #{gcn_unet_block_down_forward.1} parent=11 // pred_region
        _
      $region16: #{gcn_unet_block_down_forward.1} parent=11 // pred_fallthru
        _
      // Predicated region
      $region17: #{gcn_unet_block_down_forward.1} parent=11 // pred_check
        %p429 = pneg %p91
      $region18: #{gcn_unet_block_down_forward.1} parent=11 // pred_check_branch
        %431 = sbr.rel (%p429) target = $region20
      $region19: #{gcn_unet_block_down_forward.1} parent=11 // pred_region
        _
      $region20: #{gcn_unet_block_down_forward.1} parent=11 // pred_fallthru
        _
      // Predicated region
      $region21: #{gcn_unet_block_down_forward.1} parent=11 // pred_check
        %p432 = pneg %p112
      $region22: #{gcn_unet_block_down_forward.1} parent=11 // pred_check_branch
        %434 = sbr.rel (%p432) target = $region24
      $region23: #{gcn_unet_block_down_forward.1} parent=11 // pred_region
        _
      $region24: #{gcn_unet_block_down_forward.1} parent=11 // pred_fallthru
        _
      // Predicated region
      $region25: #{gcn_unet_block_down_forward.1} parent=11 // pred_check
        %p435 = pneg %p133
      $region26: #{gcn_unet_block_down_forward.1} parent=11 // pred_check_branch
        %437 = sbr.rel (%p435) target = $region28
      $region27: #{gcn_unet_block_down_forward.1} parent=11 // pred_region
        _
      $region28: #{gcn_unet_block_down_forward.1} parent=11 // pred_fallthru
        _
      // Predicated region
      $region29: #{gcn_unet_block_down_forward.1} parent=11 // pred_check
        %p438 = pneg %p154
      $region30: #{gcn_unet_block_down_forward.1} parent=11 // pred_check_branch
        %440 = sbr.rel (%p438) target = $region32
      $region31: #{gcn_unet_block_down_forward.1} parent=11 // pred_region
        _
      $region32: #{gcn_unet_block_down_forward.1} parent=11 // pred_fallthru
        _
      // Predicated region
      $region33: #{gcn_unet_block_down_forward.1} parent=11 // pred_check
        %p441 = pneg %p175
      $region34: #{gcn_unet_block_down_forward.1} parent=11 // pred_check_branch
        %443 = sbr.rel (%p441) target = $region36
      $region35: #{gcn_unet_block_down_forward.1} parent=11 // pred_region
        _
      $region36: #{gcn_unet_block_down_forward.1} parent=11 // pred_fallthru
        _
      // Predicated region
      $region37: #{gcn_unet_block_down_forward.1} parent=11 // pred_check
        %p444 = pneg %p196
      $region38: #{gcn_unet_block_down_forward.1} parent=11 // pred_check_branch
        %446 = sbr.rel (%p444) target = $region40
      $region39: #{gcn_unet_block_down_forward.1} parent=11 // pred_region
        _
      $region40: #{gcn_unet_block_down_forward.1} parent=11 // pred_fallthru
        _
      // Predicated region
      $region41: #{gcn_unet_block_down_forward.1} parent=11 // pred_check
        %p447 = pneg %p217
      $region42: #{gcn_unet_block_down_forward.1} parent=11 // pred_check_branch
        %449 = sbr.rel (%p447) target = $region44
      $region43: #{gcn_unet_block_down_forward.1} parent=11 // pred_region
        _
      $region44: #{gcn_unet_block_down_forward.1} parent=11 // pred_fallthru
        _
      // Predicated region
      $region45: #{gcn_unet_block_down_forward.1} parent=11 // pred_check
        %p450 = pneg %p238
      $region46: #{gcn_unet_block_down_forward.1} parent=11 // pred_check_branch
        %452 = sbr.rel (%p450) target = $region48
      $region47: #{gcn_unet_block_down_forward.1} parent=11 // pred_region
        _
      $region48: #{gcn_unet_block_down_forward.1} parent=11 // pred_fallthru
        _
      // Predicated region
      $region49: #{gcn_unet_block_down_forward.1} parent=11 // pred_check
        %p453 = pneg %p259
      $region50: #{gcn_unet_block_down_forward.1} parent=11 // pred_check_branch
        %455 = sbr.rel (%p453) target = $region52
      $region51: #{gcn_unet_block_down_forward.1} parent=11 // pred_region
        _
      $region52: #{gcn_unet_block_down_forward.1} parent=11 // pred_fallthru
        _
      // Predicated region
      $region53: #{gcn_unet_block_down_forward.1} parent=11 // pred_check
        %p456 = pneg %p280
      $region54: #{gcn_unet_block_down_forward.1} parent=11 // pred_check_branch
        %458 = sbr.rel (%p456) target = $region56
      $region55: #{gcn_unet_block_down_forward.1} parent=11 // pred_region
        _
      $region56: #{gcn_unet_block_down_forward.1} parent=11 // pred_fallthru
        _
      // Predicated region
      $region57: #{gcn_unet_block_down_forward.1} parent=11 // pred_check
        %p459 = pneg %p301
      $region58: #{gcn_unet_block_down_forward.1} parent=11 // pred_check_branch
        %461 = sbr.rel (%p459) target = $region60
      $region59: #{gcn_unet_block_down_forward.1} parent=11 // pred_region
        _
      $region60: #{gcn_unet_block_down_forward.1} parent=11 // pred_fallthru
        _
      // Predicated region
      $region61: #{gcn_unet_block_down_forward.1} parent=11 // pred_check
        %p462 = pneg %p322
      $region62: #{gcn_unet_block_down_forward.1} parent=11 // pred_check_branch
        %464 = sbr.rel (%p462) target = $region64
      $region63: #{gcn_unet_block_down_forward.1} parent=11 // pred_region
        _
      $region64: #{gcn_unet_block_down_forward.1} parent=11 // pred_fallthru
        _
      // Predicated region
      $region65: #{gcn_unet_block_down_forward.1} parent=11 // pred_check
        %p465 = pneg %p343
      $region66: #{gcn_unet_block_down_forward.1} parent=11 // pred_check_branch
        %467 = sbr.rel (%p465) target = $region68
      $region67: #{gcn_unet_block_down_forward.1} parent=11 // pred_region
        _
      $region68: #{gcn_unet_block_down_forward.1} parent=11 // pred_fallthru
        _
      // Predicated region
      $region69: #{gcn_unet_block_down_forward.1} parent=11 // pred_check
        %p468 = pneg %p364
      $region70: #{gcn_unet_block_down_forward.1} parent=11 // pred_check_branch
        %470 = sbr.rel (%p468) target = $region72
      $region71: #{gcn_unet_block_down_forward.1} parent=11 // pred_region
        _
      $region72: #{gcn_unet_block_down_forward.1} parent=11 // pred_fallthru
        _
      // Predicated region
      $region73: #{gcn_unet_block_down_forward.1} parent=11 // pred_check
        %p471 = pneg %p385
      $region74: #{gcn_unet_block_down_forward.1} parent=11 // pred_check_branch
        %473 = sbr.rel (%p471) target = $region76
      $region75: #{gcn_unet_block_down_forward.1} parent=11 // pred_region
        _
      $region76: #{gcn_unet_block_down_forward.1} parent=11 // pred_fallthru
        _
    $region12: #{gcn_unet_block_down_forward.1} parent=5 // pred_fallthru
      _
    %p474 = scmp.lt.s32.totalorder %s23, 2
    // Predicated region
    $region77: #{gcn_unet_block_down_forward.1} parent=5 // pred_check
      %p475 = pneg %p474
    $region78: #{gcn_unet_block_down_forward.1} parent=5 // pred_check_branch
      %477 = sbr.rel (%p475) target = $region80
    $region79: #{gcn_unet_block_down_forward.1} parent=5 // pred_region
      // Predicated region
      $region81: #{gcn_unet_block_down_forward.1} parent=79 // pred_check
        %p478 = pneg %p43
      $region82: #{gcn_unet_block_down_forward.1} parent=79 // pred_check_branch
        %480 = sbr.rel (%p478) target = $region84
      $region83: #{gcn_unet_block_down_forward.1} parent=79 // pred_region
        %p481 = scmp.lt.s32.totalorder %s23, 1
        %s482 = scalar_select %p481, %s23, 1
        %s483 = smul.addr %s482, 2
        %s484 = smul.addr %s483, 8
        %s485 = scalar_lea.vmem %s0, %s484
      $region84: #{gcn_unet_block_down_forward.1} parent=79 // pred_fallthru
        _
    $region80: #{gcn_unet_block_down_forward.1} parent=5 // pred_fallthru
      _
    %p486 = scmp.le.s32.totalorder 1, %s23
    %p487 = scmp.lt.s32.totalorder %s23, 3
    %p488 = pnand %p486, %p487
    %p489 = pneg %p488
    // Predicated region
    $region85: #{gcn_unet_block_down_forward.1} parent=5 // pred_check
      _
    $region86: #{gcn_unet_block_down_forward.1} parent=5 // pred_check_branch
      %491 = sbr.rel (%p488) target = $region88
    $region87: #{gcn_unet_block_down_forward.1} parent=5 // pred_region
      %s492 = ssub.s32 %s23, 1
      %p493 = scmp.lt.s32.totalorder %s28, 1
      %s494 = scalar_select %p493, %s28, 1
      %s495 = smul.addr %s494, 2
      %s496 = smul.addr %s495, 8
      %s497 = scalar_lea.vmem %s0, %s496
      %p498 = pneg %p49
      %p499 = pneg %p46
      %p500 = pneg %p70
      %p501 = pneg %p67
      %p502 = pneg %p91
      %p503 = pneg %p88
      %p504 = pneg %p112
      %p505 = pneg %p109
      %p506 = pneg %p133
      %p507 = pneg %p130
      %p508 = pneg %p154
      %p509 = pneg %p151
      %p510 = pneg %p175
      %p511 = pneg %p172
      %p512 = pneg %p196
      %p513 = pneg %p193
      %p514 = pneg %p217
      %p515 = pneg %p214
      %p516 = pneg %p238
      %p517 = pneg %p235
      %p518 = pneg %p259
      %p519 = pneg %p256
      %p520 = pneg %p280
      %p521 = pneg %p277
      %p522 = pneg %p301
      %p523 = pneg %p298
      %p524 = pneg %p322
      %p525 = pneg %p319
      %p526 = pneg %p343
      %p527 = pneg %p340
      %p528 = pneg %p364
      %p529 = pneg %p361
      %p530 = pneg %p385
      %p531 = pneg %p382
      %p532 = pneg %p411
      %p533 = pneg %p408
      %p534 = scmp.lt.s32.totalorder %s28, 1
      %s535 = scalar_select %p534, %s28, 1
      %s536 = smul.addr %s535, 2
      %s537 = smul.addr %s536, 8
      %s538 = scalar_lea.vmem %s17, %s537
      %p539 = scmp.lt.s32.totalorder %s28, 1
      %s540 = scalar_select %p539, %s28, 1
      %s541 = smul.addr %s540, 2
      %s542 = smul.addr %s541, 8
      %s543 = scalar_lea.vmem %s0, %s542
      %p544 = scmp.lt.s32.totalorder %s28, 1
      %s545 = scalar_select %p544, %s28, 1
      %s546 = smul.addr %s545, 2
      %s547 = smul.addr %s546, 8
      %s548 = scalar_lea.vmem %s17, %s547
      %v550 = vlaneseq
      %v551 = vand.u32 %v550, 127
      %v552 = vadd.s32 %v551, 128
      %v553 = vand.u32 %v551, 15
      %v554 = vand.u32 %v552, 15
      %v555 = vadd.s32 %v553, 4294967293
      %v556 = vadd.s32 %v554, 4294967293
      %vm557 = vcmp.ge.s32.totalorder %v555, 0
      %vm558 = vcmp.ge.s32.totalorder %v556, 0
      %vm559 = vcmp.lt.s32.totalorder %v555, 16
      %vm560 = vcmp.lt.s32.totalorder %v556, 16
      %vm561 = vmand %vm557, %vm559
      %vm562 = vmand %vm558, %vm560
      %v563 = vadd.s32 %v553, 4294967294
      %v564 = vadd.s32 %v554, 4294967294
      %vm565 = vcmp.ge.s32.totalorder %v563, 0
      %vm566 = vcmp.ge.s32.totalorder %v564, 0
      %vm567 = vcmp.lt.s32.totalorder %v563, 16
      %vm568 = vcmp.lt.s32.totalorder %v564, 16
      %vm569 = vmand %vm565, %vm567
      %vm570 = vmand %vm566, %vm568
      %v571 = vadd.s32 %v553, 4294967295
      %v572 = vadd.s32 %v554, 4294967295
      %vm573 = vcmp.ge.s32.totalorder %v571, 0
      %vm574 = vcmp.ge.s32.totalorder %v572, 0
      %vm575 = vcmp.lt.s32.totalorder %v571, 16
      %vm576 = vcmp.lt.s32.totalorder %v572, 16
      %vm577 = vmand %vm573, %vm575
      %vm578 = vmand %vm574, %vm576
      %v579 = vadd.s32 %v553, 1
      %v580 = vadd.s32 %v554, 1
      %vm581 = vcmp.ge.s32.totalorder %v579, 0
      %vm582 = vcmp.ge.s32.totalorder %v580, 0
      %vm583 = vcmp.lt.s32.totalorder %v579, 16
      %vm584 = vcmp.lt.s32.totalorder %v580, 16
      %vm585 = vmand %vm581, %vm583
      %vm586 = vmand %vm582, %vm584
      %v587 = vadd.s32 %v553, 2
      %v588 = vadd.s32 %v554, 2
      %vm589 = vcmp.ge.s32.totalorder %v587, 0
      %vm590 = vcmp.ge.s32.totalorder %v588, 0
      %vm591 = vcmp.lt.s32.totalorder %v587, 16
      %vm592 = vcmp.lt.s32.totalorder %v588, 16
      %vm593 = vmand %vm589, %vm591
      %vm594 = vmand %vm590, %vm592
      %v595 = vadd.s32 %v553, 3
      %v596 = vadd.s32 %v554, 3
      %vm597 = vcmp.ge.s32.totalorder %v595, 0
      %vm598 = vcmp.ge.s32.totalorder %v596, 0
      %vm599 = vcmp.lt.s32.totalorder %v595, 16
      %vm600 = vcmp.lt.s32.totalorder %v596, 16
      %vm601 = vmand %vm597, %vm599
      %vm602 = vmand %vm598, %vm600
      %v603 = vadd.s32 %v551, 4294967248
      %v604 = vadd.s32 %v552, 4294967248
      %vm605 = vcmp.ge.s32.totalorder %v603, 0
      %vm606 = vcmp.ge.s32.totalorder %v604, 0
      %vm607 = vcmp.lt.s32.totalorder %v603, 256
      %vm608 = vcmp.lt.s32.totalorder %v604, 256
      %vm609 = vmand %vm605, %vm607
      %vm610 = vmand %vm606, %vm608
      %v611 = vadd.s32 %v551, 4294967264
      %v612 = vadd.s32 %v552, 4294967264
      %vm613 = vcmp.ge.s32.totalorder %v611, 0
      %vm614 = vcmp.ge.s32.totalorder %v612, 0
      %vm615 = vcmp.lt.s32.totalorder %v611, 256
      %vm616 = vcmp.lt.s32.totalorder %v612, 256
      %vm617 = vmand %vm613, %vm615
      %vm618 = vmand %vm614, %vm616
      %v619 = vadd.s32 %v551, 4294967280
      %v620 = vadd.s32 %v552, 4294967280
      %vm621 = vcmp.ge.s32.totalorder %v619, 0
      %vm622 = vcmp.ge.s32.totalorder %v620, 0
      %vm623 = vcmp.lt.s32.totalorder %v619, 256
      %vm624 = vcmp.lt.s32.totalorder %v620, 256
      %vm625 = vmand %vm621, %vm623
      %vm626 = vmand %vm622, %vm624
      %v627 = vadd.s32 %v551, 16
      %v628 = vadd.s32 %v552, 16
      %vm629 = vcmp.ge.s32.totalorder %v627, 0
      %vm630 = vcmp.ge.s32.totalorder %v628, 0
      %vm631 = vcmp.lt.s32.totalorder %v627, 256
      %vm632 = vcmp.lt.s32.totalorder %v628, 256
      %vm633 = vmand %vm629, %vm631
      %vm634 = vmand %vm630, %vm632
      %v635 = vadd.s32 %v551, 32
      %v636 = vadd.s32 %v552, 32
      %vm637 = vcmp.ge.s32.totalorder %v635, 0
      %vm638 = vcmp.ge.s32.totalorder %v636, 0
      %vm639 = vcmp.lt.s32.totalorder %v635, 256
      %vm640 = vcmp.lt.s32.totalorder %v636, 256
      %vm641 = vmand %vm637, %vm639
      %vm642 = vmand %vm638, %vm640
      %v643 = vadd.s32 %v551, 48
      %v644 = vadd.s32 %v552, 48
      %vm645 = vcmp.ge.s32.totalorder %v643, 0
      %vm646 = vcmp.ge.s32.totalorder %v644, 0
      %vm647 = vcmp.lt.s32.totalorder %v643, 256
      %vm648 = vcmp.lt.s32.totalorder %v644, 256
      %vm649 = vmand %vm645, %vm647
      %vm650 = vmand %vm646, %vm648
      %vm651 = vmand %vm601, %vm561
      %vm652 = vmand %vm602, %vm562
      %v653 = vld [vmem:[%s543] sm:$0xff]
      %v654 = vld [vmem:[%s543 + $0x8] sm:$0xff]
      %655 = vrot.lane.b32.xlu0 %v653, 48
      %v656 = vpop.permute.xlu0 %655
      %657 = vrot.lane.b32.xlu0 %v654, 48
      %v658 = vpop.permute.xlu0 %657
      %vm659 = vcmp.lt.s32.totalorder %v551, 48
      %v660 = vsel %vm659, %v656, %v658
      %v661 = vsel %vm659, %v658, %v656
      %v662 = vsel %vm609, 1, 0
      %v663 = vsel %vm610, 1, 0
      %vm664 = vcmp.eq.s32.totalorder %v662, 1
      %vm665 = vcmp.eq.s32.totalorder %v663, 1
      %v666 = vsel %vm664, %v661, 0.0
      %v667 = vsel %vm665, %v660, 0.0
      %668 = vrot.lane.b32.xlu0 %v653, 32
      %v669 = vpop.permute.xlu0 %668
      %670 = vrot.lane.b32.xlu0 %v654, 32
      %v671 = vpop.permute.xlu0 %670
      %vm672 = vcmp.lt.s32.totalorder %v551, 32
      %v673 = vsel %vm672, %v669, %v671
      %v674 = vsel %vm672, %v671, %v669
      %v675 = vsel %vm617, 1, 0
      %v676 = vsel %vm618, 1, 0
      %vm677 = vcmp.eq.s32.totalorder %v675, 1
      %vm678 = vcmp.eq.s32.totalorder %v676, 1
      %v679 = vsel %vm677, %v674, 0.0
      %v680 = vsel %vm678, %v673, 0.0
      %681 = vrot.lane.b32.xlu0 %v653, 16
      %v682 = vpop.permute.xlu0 %681
      %683 = vrot.lane.b32.xlu0 %v654, 16
      %v684 = vpop.permute.xlu0 %683
      %vm685 = vcmp.lt.s32.totalorder %v551, 16
      %v686 = vsel %vm685, %v682, %v684
      %v687 = vsel %vm685, %v684, %v682
      %v688 = vsel %vm625, 1, 0
      %v689 = vsel %vm626, 1, 0
      %vm690 = vcmp.eq.s32.totalorder %v688, 1
      %vm691 = vcmp.eq.s32.totalorder %v689, 1
      %v692 = vsel %vm690, %v687, 0.0
      %v693 = vsel %vm691, %v686, 0.0
      %694 = vrot.lane.b32.xlu0 %v653, 112
      %v695 = vpop.permute.xlu0 %694
      %696 = vrot.lane.b32.xlu0 %v654, 112
      %v697 = vpop.permute.xlu0 %696
      %vm698 = vcmp.lt.s32.totalorder %v551, 112
      %v699 = vsel %vm698, %v695, %v697
      %v700 = vsel %vm698, %v697, %v695
      %v701 = vsel %vm633, 1, 0
      %v702 = vsel %vm634, 1, 0
      %vm703 = vcmp.eq.s32.totalorder %v701, 1
      %vm704 = vcmp.eq.s32.totalorder %v702, 1
      %v705 = vsel %vm703, %v699, 0.0
      %v706 = vsel %vm704, %v700, 0.0
      %707 = vrot.lane.b32.xlu0 %v653, 96
      %v708 = vpop.permute.xlu0 %707
      %709 = vrot.lane.b32.xlu0 %v654, 96
      %v710 = vpop.permute.xlu0 %709
      %vm711 = vcmp.lt.s32.totalorder %v551, 96
      %v712 = vsel %vm711, %v708, %v710
      %v713 = vsel %vm711, %v710, %v708
      %v714 = vsel %vm641, 1, 0
      %v715 = vsel %vm642, 1, 0
      %vm716 = vcmp.eq.s32.totalorder %v714, 1
      %vm717 = vcmp.eq.s32.totalorder %v715, 1
      %v718 = vsel %vm716, %v712, 0.0
      %v719 = vsel %vm717, %v713, 0.0
      %720 = vrot.lane.b32.xlu0 %v653, 80
      %v721 = vpop.permute.xlu0 %720
      %722 = vrot.lane.b32.xlu0 %v654, 80
      %v723 = vpop.permute.xlu0 %722
      %vm724 = vcmp.lt.s32.totalorder %v551, 80
      %v725 = vsel %vm724, %v721, %v723
      %v726 = vsel %vm724, %v723, %v721
      %v727 = vsel %vm649, 1, 0
      %v728 = vsel %vm650, 1, 0
      %vm729 = vcmp.eq.s32.totalorder %v727, 1
      %vm730 = vcmp.eq.s32.totalorder %v728, 1
      %v731 = vsel %vm729, %v725, 0.0
      %v732 = vsel %vm730, %v726, 0.0
      %v733 = vld [vmem:[%s1] sm:$0xf]
      %v734 = vpack.c.bf16 %v679, %v666
      %v735 = vpack.c.bf16 %v680, %v667
      %v736 = vpack.c.bf16 %v653, %v692
      %v737 = vpack.c.bf16 %v654, %v693
      %v738 = vpack.c.bf16 %v718, %v705
      %v739 = vpack.c.bf16 %v719, %v706
      %v740 = vpack.c.bf16 %v731, %v731
      %v741 = vpack.c.bf16 %v732, %v732
      %v742 = vld [vmem:[%s2] sm:$0xff]
      %744 = vset.pattern.permute.xlu0 0
      %745 = vperm.xlu0 %744, %v742
      %v746 = vpop.permute.xlu0 %745
      %vm748 = vcmask 457728
      %v750 = vsel %vm748, %v733, 0
      %vm752 = vcmask 1043456
      %v754 = vsel %vm752, %v740, 0
      %v757 = vsel %vm752, %v741, 0
      %759 = vmatprep.subr.bf16.mxu0 0
      %760 = vmatpush1.bf16.msra.mxu0 0
      %761 = vmatprep.subr.bf16.mxu0 0
      %762 = vmatpush1.bf16.msra.mxu0 0
      %763 = vmatprep.subr.bf16.mxu0 0
      %764 = vmatpush1.bf16.msra.mxu0 0
      %765 = vmatprep.subr.bf16.mxu0 0
      %766 = vmatpush1.bf16.msra.mxu0 0
      %767 = vmatprep.subr.bf16.mxu0 %v757
      %768 = vmatpush1.bf16.msra.mxu0 %v754
      %769 = vmatprep.subr.bf16.mxu0 %v739
      %770 = vmatpush1.bf16.msra.mxu0 %v738
      %771 = vmatprep.subr.bf16.mxu0 %v737
      %772 = vmatpush1.bf16.msra.mxu0 %v736
      %773 = vmatprep.subr.bf16.mxu0 %v735
      %774 = vmatpush1.bf16.msra.mxu0 %v734
      %775 = vmatprep.subr.bf16.mxu0 0
      %776 = vmatpush2.bf16.msra.mxu0 0
      %777 = vmatprep.subr.bf16.mxu0 0
      %778 = vmatpush2.bf16.msra.mxu0 0
      %779 = vmatprep.subr.bf16.mxu0 0
      %780 = vmatpush2.bf16.msra.mxu0 0
      %781 = vmatprep.subr.bf16.mxu0 0
      %782 = vmatpush2.bf16.msra.mxu0 0
      %783 = vmatprep.subr.bf16.mxu0 0
      %784 = vmatpush2.bf16.msra.mxu0 0
      %785 = vmatprep.subr.bf16.mxu0 0
      %786 = vmatpush2.bf16.msra.mxu0 0
      %787 = vmatprep.subr.bf16.mxu0 0
      %788 = vmatpush2.bf16.msra.mxu0 0
      %789 = vmatprep.subr.bf16.mxu0 0
      %790 = vmatpush2.bf16.msra.mxu0 0
      %791 = vmatprep.mubr.bf16.mxu0 0
      %792 = vmatmul.mubr.bf16.gmra.mxu0 %v750
      %v793 = vpop.f32.mrf.mxu0
      %v794 = vadd.f32 %v746, %v793
      %v795 = vpop.f32.mrf.mxu0
      %v796 = vadd.f32 %v746, %v795
      %v797 = vpop.f32.mrf.mxu0
      %v798 = vpop.f32.mrf.mxu0
      %799 = vdwg.mxu0
      %800 = vrot.lane.b32.xlu0 %v794, 3
      %v801 = vpop.permute.xlu0 %800
      %802 = vrot.lane.b32.xlu0 %v796, 3
      %v803 = vpop.permute.xlu0 %802
      %vm804 = vcmp.lt.s32.totalorder %v551, 3
      %v805 = vsel %vm804, %v801, %v803
      %v806 = vsel %vm804, %v803, %v801
      %v807 = vsel %vm561, 1, 0
      %v808 = vsel %vm562, 1, 0
      %vm809 = vcmp.eq.s32.totalorder %v807, 1
      %vm810 = vcmp.eq.s32.totalorder %v808, 1
      %v811 = vsel %vm809, %v806, 0.0
      %v812 = vsel %vm810, %v805, 0.0
      %813 = vrot.lane.b32.xlu0 %v794, 2
      %v814 = vpop.permute.xlu0 %813
      %815 = vrot.lane.b32.xlu0 %v796, 2
      %v816 = vpop.permute.xlu0 %815
      %vm817 = vcmp.lt.s32.totalorder %v551, 2
      %v818 = vsel %vm817, %v814, %v816
      %v819 = vsel %vm817, %v816, %v814
      %v820 = vsel %vm569, 1, 0
      %v821 = vsel %vm570, 1, 0
      %vm822 = vcmp.eq.s32.totalorder %v820, 1
      %vm823 = vcmp.eq.s32.totalorder %v821, 1
      %v824 = vsel %vm822, %v819, 0.0
      %v825 = vsel %vm823, %v818, 0.0
      %826 = vrot.lane.b32.xlu0 %v794, 1
      %v827 = vpop.permute.xlu0 %826
      %828 = vrot.lane.b32.xlu0 %v796, 1
      %v829 = vpop.permute.xlu0 %828
      %vm830 = vcmp.lt.s32.totalorder %v551, 1
      %v831 = vsel %vm830, %v827, %v829
      %v832 = vsel %vm830, %v829, %v827
      %v833 = vsel %vm577, 1, 0
      %v834 = vsel %vm578, 1, 0
      %vm835 = vcmp.eq.s32.totalorder %v833, 1
      %vm836 = vcmp.eq.s32.totalorder %v834, 1
      %v837 = vsel %vm835, %v832, 0.0
      %v838 = vsel %vm836, %v831, 0.0
      %839 = vrot.lane.b32.xlu0 %v794, 127
      %v840 = vpop.permute.xlu0 %839
      %841 = vrot.lane.b32.xlu0 %v796, 127
      %v842 = vpop.permute.xlu0 %841
      %vm843 = vcmp.lt.s32.totalorder %v551, 127
      %v844 = vsel %vm843, %v840, %v842
      %v845 = vsel %vm843, %v842, %v840
      %v846 = vsel %vm585, 1, 0
      %v847 = vsel %vm586, 1, 0
      %vm848 = vcmp.eq.s32.totalorder %v846, 1
      %vm849 = vcmp.eq.s32.totalorder %v847, 1
      %v850 = vsel %vm848, %v844, 0.0
      %v851 = vsel %vm849, %v845, 0.0
      %852 = vrot.lane.b32.xlu0 %v794, 126
      %v853 = vpop.permute.xlu0 %852
      %854 = vrot.lane.b32.xlu0 %v796, 126
      %v855 = vpop.permute.xlu0 %854
      %vm856 = vcmp.lt.s32.totalorder %v551, 126
      %v857 = vsel %vm856, %v853, %v855
      %v858 = vsel %vm856, %v855, %v853
      %v859 = vsel %vm593, 1, 0
      %v860 = vsel %vm594, 1, 0
      %vm861 = vcmp.eq.s32.totalorder %v859, 1
      %vm862 = vcmp.eq.s32.totalorder %v860, 1
      %v863 = vsel %vm861, %v857, 0.0
      %v864 = vsel %vm862, %v858, 0.0
      %865 = vrot.lane.b32.xlu0 %v794, 125
      %v866 = vpop.permute.xlu0 %865
      %867 = vrot.lane.b32.xlu0 %v796, 125
      %v868 = vpop.permute.xlu0 %867
      %vm869 = vcmp.lt.s32.totalorder %v551, 125
      %v870 = vsel %vm869, %v866, %v868
      %v871 = vsel %vm869, %v868, %v866
      %v872 = vsel %vm601, 1, 0
      %v873 = vsel %vm602, 1, 0
      %vm874 = vcmp.eq.s32.totalorder %v872, 1
      %vm875 = vcmp.eq.s32.totalorder %v873, 1
      %v876 = vsel %vm874, %v870, 0.0
      %v877 = vsel %vm875, %v871, 0.0
      %v878 = vld [vmem:[%s3] sm:$0xf]
      %v879 = vpack.c.bf16 %v824, %v811
      %v880 = vpack.c.bf16 %v825, %v812
      %v881 = vpack.c.bf16 %v794, %v837
      %v882 = vpack.c.bf16 %v796, %v838
      %v883 = vpack.c.bf16 %v863, %v850
      %v884 = vpack.c.bf16 %v864, %v851
      %v885 = vpack.c.bf16 %v876, %v876
      %v886 = vpack.c.bf16 %v877, %v877
      %v887 = vld [vmem:[%s4] sm:$0xff]
      %889 = vset.pattern.permute.xlu0 0
      %890 = vperm.xlu0 %889, %v887
      %v891 = vpop.permute.xlu0 %890
      %v894 = vsel %vm748, %v878, 0
      %v897 = vsel %vm752, %v885, 0
      %v900 = vsel %vm752, %v886, 0
      %902 = vmatprep.subr.bf16.mxu0 0
      %903 = vmatpush1.bf16.msra.mxu0 0
      %904 = vmatprep.subr.bf16.mxu0 0
      %905 = vmatpush1.bf16.msra.mxu0 0
      %906 = vmatprep.subr.bf16.mxu0 0
      %907 = vmatpush1.bf16.msra.mxu0 0
      %908 = vmatprep.subr.bf16.mxu0 0
      %909 = vmatpush1.bf16.msra.mxu0 0
      %910 = vmatprep.subr.bf16.mxu0 %v900
      %911 = vmatpush1.bf16.msra.mxu0 %v897
      %912 = vmatprep.subr.bf16.mxu0 %v884
      %913 = vmatpush1.bf16.msra.mxu0 %v883
      %914 = vmatprep.subr.bf16.mxu0 %v882
      %915 = vmatpush1.bf16.msra.mxu0 %v881
      %916 = vmatprep.subr.bf16.mxu0 %v880
      %917 = vmatpush1.bf16.msra.mxu0 %v879
      %918 = vmatprep.subr.bf16.mxu0 0
      %919 = vmatpush2.bf16.msra.mxu0 0
      %920 = vmatprep.subr.bf16.mxu0 0
      %921 = vmatpush2.bf16.msra.mxu0 0
      %922 = vmatprep.subr.bf16.mxu0 0
      %923 = vmatpush2.bf16.msra.mxu0 0
      %924 = vmatprep.subr.bf16.mxu0 0
      %925 = vmatpush2.bf16.msra.mxu0 0
      %926 = vmatprep.subr.bf16.mxu0 0
      %927 = vmatpush2.bf16.msra.mxu0 0
      %928 = vmatprep.subr.bf16.mxu0 0
      %929 = vmatpush2.bf16.msra.mxu0 0
      %930 = vmatprep.subr.bf16.mxu0 0
      %931 = vmatpush2.bf16.msra.mxu0 0
      %932 = vmatprep.subr.bf16.mxu0 0
      %933 = vmatpush2.bf16.msra.mxu0 0
      %934 = vmatprep.mubr.bf16.mxu0 0
      %935 = vmatmul.mubr.bf16.gmra.mxu0 %v894
      %v936 = vpop.f32.mrf.mxu0
      %v937 = vadd.f32 %v891, %v936
      %v938 = vpop.f32.mrf.mxu0
      %v939 = vadd.f32 %v891, %v938
      %v940 = vpop.f32.mrf.mxu0
      %v941 = vpop.f32.mrf.mxu0
      %942 = vdwg.mxu0
      %943 = vrot.lane.b32.xlu0 %v653, 3
      %v944 = vpop.permute.xlu0 %943
      %945 = vrot.lane.b32.xlu0 %v654, 3
      %v946 = vpop.permute.xlu0 %945
      %v947 = vsel %vm804, %v944, %v946
      %v948 = vsel %vm804, %v946, %v944
      %v949 = vsel %vm809, %v948, 0.0
      %v950 = vsel %vm810, %v947, 0.0
      %951 = vrot.lane.b32.xlu0 %v653, 2
      %v952 = vpop.permute.xlu0 %951
      %953 = vrot.lane.b32.xlu0 %v654, 2
      %v954 = vpop.permute.xlu0 %953
      %v955 = vsel %vm817, %v952, %v954
      %v956 = vsel %vm817, %v954, %v952
      %v957 = vsel %vm822, %v956, 0.0
      %v958 = vsel %vm823, %v955, 0.0
      %959 = vrot.lane.b32.xlu0 %v653, 1
      %v960 = vpop.permute.xlu0 %959
      %961 = vrot.lane.b32.xlu0 %v654, 1
      %v962 = vpop.permute.xlu0 %961
      %v963 = vsel %vm830, %v960, %v962
      %v964 = vsel %vm830, %v962, %v960
      %v965 = vsel %vm835, %v964, 0.0
      %v966 = vsel %vm836, %v963, 0.0
      %967 = vrot.lane.b32.xlu0 %v653, 127
      %v968 = vpop.permute.xlu0 %967
      %969 = vrot.lane.b32.xlu0 %v654, 127
      %v970 = vpop.permute.xlu0 %969
      %v971 = vsel %vm843, %v968, %v970
      %v972 = vsel %vm843, %v970, %v968
      %v973 = vsel %vm848, %v971, 0.0
      %v974 = vsel %vm849, %v972, 0.0
      %975 = vrot.lane.b32.xlu0 %v653, 126
      %v976 = vpop.permute.xlu0 %975
      %977 = vrot.lane.b32.xlu0 %v654, 126
      %v978 = vpop.permute.xlu0 %977
      %v979 = vsel %vm856, %v976, %v978
      %v980 = vsel %vm856, %v978, %v976
      %v981 = vsel %vm861, %v979, 0.0
      %v982 = vsel %vm862, %v980, 0.0
      %983 = vrot.lane.b32.xlu0 %v653, 125
      %v984 = vpop.permute.xlu0 %983
      %985 = vrot.lane.b32.xlu0 %v654, 125
      %v986 = vpop.permute.xlu0 %985
      %v987 = vsel %vm869, %v984, %v986
      %v988 = vsel %vm869, %v986, %v984
      %v989 = vsel %vm874, %v987, 0.0
      %v990 = vsel %vm875, %v988, 0.0
      %v991 = vld [vmem:[%s5] sm:$0xf]
      %v992 = vpack.c.bf16 %v957, %v949
      %v993 = vpack.c.bf16 %v958, %v950
      %v994 = vpack.c.bf16 %v653, %v965
      %v995 = vpack.c.bf16 %v654, %v966
      %v996 = vpack.c.bf16 %v981, %v973
      %v997 = vpack.c.bf16 %v982, %v974
      %v998 = vpack.c.bf16 %v989, %v989
      %v999 = vpack.c.bf16 %v990, %v990
      %v1001 = vsel %vm748, %v991, 0
      %v1004 = vsel %vm752, %v998, 0
      %v1007 = vsel %vm752, %v999, 0
      %1009 = vmatprep.subr.bf16.mxu0 0
      %1010 = vmatpush1.bf16.msra.mxu0 0
      %1011 = vmatprep.subr.bf16.mxu0 0
      %1012 = vmatpush1.bf16.msra.mxu0 0
      %1013 = vmatprep.subr.bf16.mxu0 0
      %1014 = vmatpush1.bf16.msra.mxu0 0
      %1015 = vmatprep.subr.bf16.mxu0 0
      %1016 = vmatpush1.bf16.msra.mxu0 0
      %1017 = vmatprep.subr.bf16.mxu0 %v1007
      %1018 = vmatpush1.bf16.msra.mxu0 %v1004
      %1019 = vmatprep.subr.bf16.mxu0 %v997
      %1020 = vmatpush1.bf16.msra.mxu0 %v996
      %1021 = vmatprep.subr.bf16.mxu0 %v995
      %1022 = vmatpush1.bf16.msra.mxu0 %v994
      %1023 = vmatprep.subr.bf16.mxu0 %v993
      %1024 = vmatpush1.bf16.msra.mxu0 %v992
      %1025 = vmatprep.subr.bf16.mxu0 0
      %1026 = vmatpush2.bf16.msra.mxu0 0
      %1027 = vmatprep.subr.bf16.mxu0 0
      %1028 = vmatpush2.bf16.msra.mxu0 0
      %1029 = vmatprep.subr.bf16.mxu0 0
      %1030 = vmatpush2.bf16.msra.mxu0 0
      %1031 = vmatprep.subr.bf16.mxu0 0
      %1032 = vmatpush2.bf16.msra.mxu0 0
      %1033 = vmatprep.subr.bf16.mxu0 0
      %1034 = vmatpush2.bf16.msra.mxu0 0
      %1035 = vmatprep.subr.bf16.mxu0 0
      %1036 = vmatpush2.bf16.msra.mxu0 0
      %1037 = vmatprep.subr.bf16.mxu0 0
      %1038 = vmatpush2.bf16.msra.mxu0 0
      %1039 = vmatprep.subr.bf16.mxu0 0
      %1040 = vmatpush2.bf16.msra.mxu0 0
      %1041 = vmatprep.mubr.bf16.mxu0 0
      %1042 = vmatmul.mubr.bf16.gmra.mxu0 %v1001
      %v1043 = vpop.f32.mrf.mxu0
      %v1044 = vadd.f32 0.0, %v1043
      %v1045 = vpop.f32.mrf.mxu0
      %v1046 = vadd.f32 0.0, %v1045
      %v1047 = vpop.f32.mrf.mxu0
      %v1048 = vpop.f32.mrf.mxu0
      %1049 = vdwg.mxu0
      %v1050 = vsel %vm651, 1, 0
      %v1051 = vsel %vm652, 1, 0
      %vm1052 = vcmp.eq.s32.totalorder %v1050, 1
      %vm1053 = vcmp.eq.s32.totalorder %v1051, 1
      %v1054 = vsel %vm1052, %v1044, 0.0
      %v1055 = vsel %vm1053, %v1046, 0.0
      %1056 = vrot.lane.b32.xlu0 %v1054, 48
      %v1057 = vpop.permute.xlu0 %1056
      %1058 = vrot.lane.b32.xlu0 %v1055, 48
      %v1059 = vpop.permute.xlu0 %1058
      %v1060 = vsel %vm659, %v1057, %v1059
      %v1061 = vsel %vm659, %v1059, %v1057
      %v1062 = vsel %vm664, %v1061, 0.0
      %v1063 = vsel %vm665, %v1060, 0.0
      %1064 = vrot.lane.b32.xlu0 %v1054, 32
      %v1065 = vpop.permute.xlu0 %1064
      %1066 = vrot.lane.b32.xlu0 %v1055, 32
      %v1067 = vpop.permute.xlu0 %1066
      %v1068 = vsel %vm672, %v1065, %v1067
      %v1069 = vsel %vm672, %v1067, %v1065
      %v1070 = vsel %vm677, %v1069, 0.0
      %v1071 = vsel %vm678, %v1068, 0.0
      %1072 = vrot.lane.b32.xlu0 %v1054, 16
      %v1073 = vpop.permute.xlu0 %1072
      %1074 = vrot.lane.b32.xlu0 %v1055, 16
      %v1075 = vpop.permute.xlu0 %1074
      %v1076 = vsel %vm685, %v1073, %v1075
      %v1077 = vsel %vm685, %v1075, %v1073
      %v1078 = vsel %vm690, %v1077, 0.0
      %v1079 = vsel %vm691, %v1076, 0.0
      %1080 = vrot.lane.b32.xlu0 %v1054, 112
      %v1081 = vpop.permute.xlu0 %1080
      %1082 = vrot.lane.b32.xlu0 %v1055, 112
      %v1083 = vpop.permute.xlu0 %1082
      %v1084 = vsel %vm698, %v1081, %v1083
      %v1085 = vsel %vm698, %v1083, %v1081
      %v1086 = vsel %vm703, %v1084, 0.0
      %v1087 = vsel %vm704, %v1085, 0.0
      %1088 = vrot.lane.b32.xlu0 %v1054, 96
      %v1089 = vpop.permute.xlu0 %1088
      %1090 = vrot.lane.b32.xlu0 %v1055, 96
      %v1091 = vpop.permute.xlu0 %1090
      %v1092 = vsel %vm711, %v1089, %v1091
      %v1093 = vsel %vm711, %v1091, %v1089
      %v1094 = vsel %vm716, %v1092, 0.0
      %v1095 = vsel %vm717, %v1093, 0.0
      %1096 = vrot.lane.b32.xlu0 %v1054, 80
      %v1097 = vpop.permute.xlu0 %1096
      %1098 = vrot.lane.b32.xlu0 %v1055, 80
      %v1099 = vpop.permute.xlu0 %1098
      %v1100 = vsel %vm724, %v1097, %v1099
      %v1101 = vsel %vm724, %v1099, %v1097
      %v1102 = vsel %vm729, %v1100, 0.0
      %v1103 = vsel %vm730, %v1101, 0.0
      %v1104 = vld [vmem:[%s6] sm:$0xf]
      %v1105 = vpack.c.bf16 %v1070, %v1062
      %v1106 = vpack.c.bf16 %v1071, %v1063
      %v1107 = vpack.c.bf16 %v1054, %v1078
      %v1108 = vpack.c.bf16 %v1055, %v1079
      %v1109 = vpack.c.bf16 %v1094, %v1086
      %v1110 = vpack.c.bf16 %v1095, %v1087
      %v1111 = vpack.c.bf16 %v1102, %v1102
      %v1112 = vpack.c.bf16 %v1103, %v1103
      %v1113 = vld [vmem:[%s7] sm:$0xff]
      %1115 = vset.pattern.permute.xlu0 0
      %1116 = vperm.xlu0 %1115, %v1113
      %v1117 = vpop.permute.xlu0 %1116
      %v1120 = vsel %vm748, %v1104, 0
      %v1123 = vsel %vm752, %v1111, 0
      %v1126 = vsel %vm752, %v1112, 0
      %1128 = vmatprep.subr.bf16.mxu0 0
      %1129 = vmatpush1.bf16.msra.mxu0 0
      %1130 = vmatprep.subr.bf16.mxu0 0
      %1131 = vmatpush1.bf16.msra.mxu0 0
      %1132 = vmatprep.subr.bf16.mxu0 0
      %1133 = vmatpush1.bf16.msra.mxu0 0
      %1134 = vmatprep.subr.bf16.mxu0 0
      %1135 = vmatpush1.bf16.msra.mxu0 0
      %1136 = vmatprep.subr.bf16.mxu0 %v1126
      %1137 = vmatpush1.bf16.msra.mxu0 %v1123
      %1138 = vmatprep.subr.bf16.mxu0 %v1110
      %1139 = vmatpush1.bf16.msra.mxu0 %v1109
      %1140 = vmatprep.subr.bf16.mxu0 %v1108
      %1141 = vmatpush1.bf16.msra.mxu0 %v1107
      %1142 = vmatprep.subr.bf16.mxu0 %v1106
      %1143 = vmatpush1.bf16.msra.mxu0 %v1105
      %1144 = vmatprep.subr.bf16.mxu0 0
      %1145 = vmatpush2.bf16.msra.mxu0 0
      %1146 = vmatprep.subr.bf16.mxu0 0
      %1147 = vmatpush2.bf16.msra.mxu0 0
      %1148 = vmatprep.subr.bf16.mxu0 0
      %1149 = vmatpush2.bf16.msra.mxu0 0
      %1150 = vmatprep.subr.bf16.mxu0 0
      %1151 = vmatpush2.bf16.msra.mxu0 0
      %1152 = vmatprep.subr.bf16.mxu0 0
      %1153 = vmatpush2.bf16.msra.mxu0 0
      %1154 = vmatprep.subr.bf16.mxu0 0
      %1155 = vmatpush2.bf16.msra.mxu0 0
      %1156 = vmatprep.subr.bf16.mxu0 0
      %1157 = vmatpush2.bf16.msra.mxu0 0
      %1158 = vmatprep.subr.bf16.mxu0 0
      %1159 = vmatpush2.bf16.msra.mxu0 0
      %1160 = vmatprep.mubr.bf16.mxu0 0
      %1161 = vmatmul.mubr.bf16.gmra.mxu0 %v1120
      %v1162 = vpop.f32.mrf.mxu0
      %v1163 = vadd.f32 %v1117, %v1162
      %v1164 = vpop.f32.mrf.mxu0
      %v1165 = vadd.f32 %v1117, %v1164
      %v1166 = vpop.f32.mrf.mxu0
      %v1167 = vpop.f32.mrf.mxu0
      %1168 = vdwg.mxu0
      %v1169 = vld [vmem:[%s8] sm:$0xff]
      %1171 = vset.pattern.permute.xlu0 0
      %1172 = vperm.xlu0 %1171, %v1169
      %v1173 = vpop.permute.xlu0 %1172
      %v1175 = vsel %vm1052, %v1173, 0.0
      %v1176 = vsel %vm1053, %v1173, 0.0
      %v1177 = vadd.f32 %v1163, %v1175
      %v1178 = vadd.f32 %v1165, %v1176
      %v1179 = vadd.f32 %v937, %v1177
      %v1180 = vadd.f32 %v939, %v1178
      %v1181 = vadd.f32 %v1179, %v1180
      %1182 = vadd.xlane.f32.xlu0 %v1181
      %v1183 = vpop.xlane.xlu0 %1182
      %v1184 = vmul.f32 %v1183, 0.00390625
      %v1185 = vsub.f32 %v1179, %v1184
      %v1186 = vsub.f32 %v1180, %v1184
      %v1187 = vmul.f32 %v1185, %v1185
      %v1188 = vmul.f32 %v1186, %v1186
      %v1189 = vadd.f32 %v1187, %v1188
      %1190 = vadd.xlane.f32.xlu0 %v1189
      %v1191 = vpop.xlane.xlu0 %1190
      %v1192 = vmul.f32 %v1191, 0.00390625
      %v1193 = vadd.f32 %v1192, 1e-05
      %v1194 = vrsqrt.pop %v1193
      %v1195 = vmul.f32 %v1185, %v1194
      %v1196 = vmul.f32 %v1186, %v1194
      %v1197 = vmul.f32 %v1195, 0.2
      %v1198 = vmul.f32 %v1196, 0.2
      %v1199 = vmax.f32 %v1195, %v1197
      %v1200 = vmax.f32 %v1196, %v1198
      %1201 = vrot.lane.b32.xlu0 %v1199, 48
      %v1202 = vpop.permute.xlu0 %1201
      %1203 = vrot.lane.b32.xlu0 %v1200, 48
      %v1204 = vpop.permute.xlu0 %1203
      %v1205 = vsel %vm659, %v1202, %v1204
      %v1206 = vsel %vm659, %v1204, %v1202
      %v1207 = vsel %vm664, %v1206, 0.0
      %v1208 = vsel %vm665, %v1205, 0.0
      %1209 = vrot.lane.b32.xlu0 %v1199, 32
      %v1210 = vpop.permute.xlu0 %1209
      %1211 = vrot.lane.b32.xlu0 %v1200, 32
      %v1212 = vpop.permute.xlu0 %1211
      %v1213 = vsel %vm672, %v1210, %v1212
      %v1214 = vsel %vm672, %v1212, %v1210
      %v1215 = vsel %vm677, %v1214, 0.0
      %v1216 = vsel %vm678, %v1213, 0.0
      %1217 = vrot.lane.b32.xlu0 %v1199, 16
      %v1218 = vpop.permute.xlu0 %1217
      %1219 = vrot.lane.b32.xlu0 %v1200, 16
      %v1220 = vpop.permute.xlu0 %1219
      %v1221 = vsel %vm685, %v1218, %v1220
      %v1222 = vsel %vm685, %v1220, %v1218
      %v1223 = vsel %vm690, %v1222, 0.0
      %v1224 = vsel %vm691, %v1221, 0.0
      %1225 = vrot.lane.b32.xlu0 %v1199, 112
      %v1226 = vpop.permute.xlu0 %1225
      %1227 = vrot.lane.b32.xlu0 %v1200, 112
      %v1228 = vpop.permute.xlu0 %1227
      %v1229 = vsel %vm698, %v1226, %v1228
      %v1230 = vsel %vm698, %v1228, %v1226
      %v1231 = vsel %vm703, %v1229, 0.0
      %v1232 = vsel %vm704, %v1230, 0.0
      %1233 = vrot.lane.b32.xlu0 %v1199, 96
      %v1234 = vpop.permute.xlu0 %1233
      %1235 = vrot.lane.b32.xlu0 %v1200, 96
      %v1236 = vpop.permute.xlu0 %1235
      %v1237 = vsel %vm711, %v1234, %v1236
      %v1238 = vsel %vm711, %v1236, %v1234
      %v1239 = vsel %vm716, %v1237, 0.0
      %v1240 = vsel %vm717, %v1238, 0.0
      %1241 = vrot.lane.b32.xlu0 %v1199, 80
      %v1242 = vpop.permute.xlu0 %1241
      %1243 = vrot.lane.b32.xlu0 %v1200, 80
      %v1244 = vpop.permute.xlu0 %1243
      %v1245 = vsel %vm724, %v1242, %v1244
      %v1246 = vsel %vm724, %v1244, %v1242
      %v1247 = vsel %vm729, %v1245, 0.0
      %v1248 = vsel %vm730, %v1246, 0.0
      %v1249 = vld [vmem:[%s9] sm:$0xf]
      %v1250 = vpack.c.bf16 %v1215, %v1207
      %v1251 = vpack.c.bf16 %v1216, %v1208
      %v1252 = vpack.c.bf16 %v1199, %v1223
      %v1253 = vpack.c.bf16 %v1200, %v1224
      %v1254 = vpack.c.bf16 %v1239, %v1231
      %v1255 = vpack.c.bf16 %v1240, %v1232
      %v1256 = vpack.c.bf16 %v1247, %v1247
      %v1257 = vpack.c.bf16 %v1248, %v1248
      %v1258 = vld [vmem:[%s10] sm:$0xff]
      %1260 = vset.pattern.permute.xlu0 0
      %1261 = vperm.xlu0 %1260, %v1258
      %v1262 = vpop.permute.xlu0 %1261
      %v1265 = vsel %vm748, %v1249, 0
      %v1268 = vsel %vm752, %v1256, 0
      %v1271 = vsel %vm752, %v1257, 0
      %1273 = vmatprep.subr.bf16.mxu0 0
      %1274 = vmatpush1.bf16.msra.mxu0 0
      %1275 = vmatprep.subr.bf16.mxu0 0
      %1276 = vmatpush1.bf16.msra.mxu0 0
      %1277 = vmatprep.subr.bf16.mxu0 0
      %1278 = vmatpush1.bf16.msra.mxu0 0
      %1279 = vmatprep.subr.bf16.mxu0 0
      %1280 = vmatpush1.bf16.msra.mxu0 0
      %1281 = vmatprep.subr.bf16.mxu0 %v1271
      %1282 = vmatpush1.bf16.msra.mxu0 %v1268
      %1283 = vmatprep.subr.bf16.mxu0 %v1255
      %1284 = vmatpush1.bf16.msra.mxu0 %v1254
      %1285 = vmatprep.subr.bf16.mxu0 %v1253
      %1286 = vmatpush1.bf16.msra.mxu0 %v1252
      %1287 = vmatprep.subr.bf16.mxu0 %v1251
      %1288 = vmatpush1.bf16.msra.mxu0 %v1250
      %1289 = vmatprep.subr.bf16.mxu0 0
      %1290 = vmatpush2.bf16.msra.mxu0 0
      %1291 = vmatprep.subr.bf16.mxu0 0
      %1292 = vmatpush2.bf16.msra.mxu0 0
      %1293 = vmatprep.subr.bf16.mxu0 0
      %1294 = vmatpush2.bf16.msra.mxu0 0
      %1295 = vmatprep.subr.bf16.mxu0 0
      %1296 = vmatpush2.bf16.msra.mxu0 0
      %1297 = vmatprep.subr.bf16.mxu0 0
      %1298 = vmatpush2.bf16.msra.mxu0 0
      %1299 = vmatprep.subr.bf16.mxu0 0
      %1300 = vmatpush2.bf16.msra.mxu0 0
      %1301 = vmatprep.subr.bf16.mxu0 0
      %1302 = vmatpush2.bf16.msra.mxu0 0
      %1303 = vmatprep.subr.bf16.mxu0 0
      %1304 = vmatpush2.bf16.msra.mxu0 0
      %1305 = vmatprep.mubr.bf16.mxu0 0
      %1306 = vmatmul.mubr.bf16.gmra.mxu0 %v1265
      %v1307 = vpop.f32.mrf.mxu0
      %v1308 = vadd.f32 %v1262, %v1307
      %v1309 = vpop.f32.mrf.mxu0
      %v1310 = vadd.f32 %v1262, %v1309
      %v1311 = vpop.f32.mrf.mxu0
      %v1312 = vpop.f32.mrf.mxu0
      %1313 = vdwg.mxu0
      %1314 = vrot.lane.b32.xlu0 %v1308, 3
      %v1315 = vpop.permute.xlu0 %1314
      %1316 = vrot.lane.b32.xlu0 %v1310, 3
      %v1317 = vpop.permute.xlu0 %1316
      %v1318 = vsel %vm804, %v1315, %v1317
      %v1319 = vsel %vm804, %v1317, %v1315
      %v1320 = vsel %vm809, %v1319, 0.0
      %v1321 = vsel %vm810, %v1318, 0.0
      %1322 = vrot.lane.b32.xlu0 %v1308, 2
      %v1323 = vpop.permute.xlu0 %1322
      %1324 = vrot.lane.b32.xlu0 %v1310, 2
      %v1325 = vpop.permute.xlu0 %1324
      %v1326 = vsel %vm817, %v1323, %v1325
      %v1327 = vsel %vm817, %v1325, %v1323
      %v1328 = vsel %vm822, %v1327, 0.0
      %v1329 = vsel %vm823, %v1326, 0.0
      %1330 = vrot.lane.b32.xlu0 %v1308, 1
      %v1331 = vpop.permute.xlu0 %1330
      %1332 = vrot.lane.b32.xlu0 %v1310, 1
      %v1333 = vpop.permute.xlu0 %1332
      %v1334 = vsel %vm830, %v1331, %v1333
      %v1335 = vsel %vm830, %v1333, %v1331
      %v1336 = vsel %vm835, %v1335, 0.0
      %v1337 = vsel %vm836, %v1334, 0.0
      %1338 = vrot.lane.b32.xlu0 %v1308, 127
      %v1339 = vpop.permute.xlu0 %1338
      %1340 = vrot.lane.b32.xlu0 %v1310, 127
      %v1341 = vpop.permute.xlu0 %1340
      %v1342 = vsel %vm843, %v1339, %v1341
      %v1343 = vsel %vm843, %v1341, %v1339
      %v1344 = vsel %vm848, %v1342, 0.0
      %v1345 = vsel %vm849, %v1343, 0.0
      %1346 = vrot.lane.b32.xlu0 %v1308, 126
      %v1347 = vpop.permute.xlu0 %1346
      %1348 = vrot.lane.b32.xlu0 %v1310, 126
      %v1349 = vpop.permute.xlu0 %1348
      %v1350 = vsel %vm856, %v1347, %v1349
      %v1351 = vsel %vm856, %v1349, %v1347
      %v1352 = vsel %vm861, %v1350, 0.0
      %v1353 = vsel %vm862, %v1351, 0.0
      %1354 = vrot.lane.b32.xlu0 %v1308, 125
      %v1355 = vpop.permute.xlu0 %1354
      %1356 = vrot.lane.b32.xlu0 %v1310, 125
      %v1357 = vpop.permute.xlu0 %1356
      %v1358 = vsel %vm869, %v1355, %v1357
      %v1359 = vsel %vm869, %v1357, %v1355
      %v1360 = vsel %vm874, %v1358, 0.0
      %v1361 = vsel %vm875, %v1359, 0.0
      %v1362 = vld [vmem:[%s11] sm:$0xf]
      %v1363 = vpack.c.bf16 %v1328, %v1320
      %v1364 = vpack.c.bf16 %v1329, %v1321
      %v1365 = vpack.c.bf16 %v1308, %v1336
      %v1366 = vpack.c.bf16 %v1310, %v1337
      %v1367 = vpack.c.bf16 %v1352, %v1344
      %v1368 = vpack.c.bf16 %v1353, %v1345
      %v1369 = vpack.c.bf16 %v1360, %v1360
      %v1370 = vpack.c.bf16 %v1361, %v1361
      %v1371 = vld [vmem:[%s12] sm:$0xff]
      %1373 = vset.pattern.permute.xlu0 0
      %1374 = vperm.xlu0 %1373, %v1371
      %v1375 = vpop.permute.xlu0 %1374
      %v1378 = vsel %vm748, %v1362, 0
      %v1381 = vsel %vm752, %v1369, 0
      %v1384 = vsel %vm752, %v1370, 0
      %1386 = vmatprep.subr.bf16.mxu0 0
      %1387 = vmatpush1.bf16.msra.mxu0 0
      %1388 = vmatprep.subr.bf16.mxu0 0
      %1389 = vmatpush1.bf16.msra.mxu0 0
      %1390 = vmatprep.subr.bf16.mxu0 0
      %1391 = vmatpush1.bf16.msra.mxu0 0
      %1392 = vmatprep.subr.bf16.mxu0 0
      %1393 = vmatpush1.bf16.msra.mxu0 0
      %1394 = vmatprep.subr.bf16.mxu0 %v1384
      %1395 = vmatpush1.bf16.msra.mxu0 %v1381
      %1396 = vmatprep.subr.bf16.mxu0 %v1368
      %1397 = vmatpush1.bf16.msra.mxu0 %v1367
      %1398 = vmatprep.subr.bf16.mxu0 %v1366
      %1399 = vmatpush1.bf16.msra.mxu0 %v1365
      %1400 = vmatprep.subr.bf16.mxu0 %v1364
      %1401 = vmatpush1.bf16.msra.mxu0 %v1363
      %1402 = vmatprep.subr.bf16.mxu0 0
      %1403 = vmatpush2.bf16.msra.mxu0 0
      %1404 = vmatprep.subr.bf16.mxu0 0
      %1405 = vmatpush2.bf16.msra.mxu0 0
      %1406 = vmatprep.subr.bf16.mxu0 0
      %1407 = vmatpush2.bf16.msra.mxu0 0
      %1408 = vmatprep.subr.bf16.mxu0 0
      %1409 = vmatpush2.bf16.msra.mxu0 0
      %1410 = vmatprep.subr.bf16.mxu0 0
      %1411 = vmatpush2.bf16.msra.mxu0 0
      %1412 = vmatprep.subr.bf16.mxu0 0
      %1413 = vmatpush2.bf16.msra.mxu0 0
      %1414 = vmatprep.subr.bf16.mxu0 0
      %1415 = vmatpush2.bf16.msra.mxu0 0
      %1416 = vmatprep.subr.bf16.mxu0 0
      %1417 = vmatpush2.bf16.msra.mxu0 0
      %1418 = vmatprep.mubr.bf16.mxu0 0
      %1419 = vmatmul.mubr.bf16.gmra.mxu0 %v1378
      %v1420 = vpop.f32.mrf.mxu0
      %v1421 = vadd.f32 %v1375, %v1420
      %v1422 = vpop.f32.mrf.mxu0
      %v1423 = vadd.f32 %v1375, %v1422
      %v1424 = vpop.f32.mrf.mxu0
      %v1425 = vpop.f32.mrf.mxu0
      %1426 = vdwg.mxu0
      %1427 = vrot.lane.b32.xlu0 %v1199, 3
      %v1428 = vpop.permute.xlu0 %1427
      %1429 = vrot.lane.b32.xlu0 %v1200, 3
      %v1430 = vpop.permute.xlu0 %1429
      %v1431 = vsel %vm804, %v1428, %v1430
      %v1432 = vsel %vm804, %v1430, %v1428
      %v1433 = vsel %vm809, %v1432, 0.0
      %v1434 = vsel %vm810, %v1431, 0.0
      %1435 = vrot.lane.b32.xlu0 %v1199, 2
      %v1436 = vpop.permute.xlu0 %1435
      %1437 = vrot.lane.b32.xlu0 %v1200, 2
      %v1438 = vpop.permute.xlu0 %1437
      %v1439 = vsel %vm817, %v1436, %v1438
      %v1440 = vsel %vm817, %v1438, %v1436
      %v1441 = vsel %vm822, %v1440, 0.0
      %v1442 = vsel %vm823, %v1439, 0.0
      %1443 = vrot.lane.b32.xlu0 %v1199, 1
      %v1444 = vpop.permute.xlu0 %1443
      %1445 = vrot.lane.b32.xlu0 %v1200, 1
      %v1446 = vpop.permute.xlu0 %1445
      %v1447 = vsel %vm830, %v1444, %v1446
      %v1448 = vsel %vm830, %v1446, %v1444
      %v1449 = vsel %vm835, %v1448, 0.0
      %v1450 = vsel %vm836, %v1447, 0.0
      %1451 = vrot.lane.b32.xlu0 %v1199, 127
      %v1452 = vpop.permute.xlu0 %1451
      %1453 = vrot.lane.b32.xlu0 %v1200, 127
      %v1454 = vpop.permute.xlu0 %1453
      %v1455 = vsel %vm843, %v1452, %v1454
      %v1456 = vsel %vm843, %v1454, %v1452
      %v1457 = vsel %vm848, %v1455, 0.0
      %v1458 = vsel %vm849, %v1456, 0.0
      %1459 = vrot.lane.b32.xlu0 %v1199, 126
      %v1460 = vpop.permute.xlu0 %1459
      %1461 = vrot.lane.b32.xlu0 %v1200, 126
      %v1462 = vpop.permute.xlu0 %1461
      %v1463 = vsel %vm856, %v1460, %v1462
      %v1464 = vsel %vm856, %v1462, %v1460
      %v1465 = vsel %vm861, %v1463, 0.0
      %v1466 = vsel %vm862, %v1464, 0.0
      %1467 = vrot.lane.b32.xlu0 %v1199, 125
      %v1468 = vpop.permute.xlu0 %1467
      %1469 = vrot.lane.b32.xlu0 %v1200, 125
      %v1470 = vpop.permute.xlu0 %1469
      %v1471 = vsel %vm869, %v1468, %v1470
      %v1472 = vsel %vm869, %v1470, %v1468
      %v1473 = vsel %vm874, %v1471, 0.0
      %v1474 = vsel %vm875, %v1472, 0.0
      %v1475 = vld [vmem:[%s13] sm:$0xf]
      %v1476 = vpack.c.bf16 %v1441, %v1433
      %v1477 = vpack.c.bf16 %v1442, %v1434
      %v1478 = vpack.c.bf16 %v1199, %v1449
      %v1479 = vpack.c.bf16 %v1200, %v1450
      %v1480 = vpack.c.bf16 %v1465, %v1457
      %v1481 = vpack.c.bf16 %v1466, %v1458
      %v1482 = vpack.c.bf16 %v1473, %v1473
      %v1483 = vpack.c.bf16 %v1474, %v1474
      %v1485 = vsel %vm748, %v1475, 0
      %v1488 = vsel %vm752, %v1482, 0
      %v1491 = vsel %vm752, %v1483, 0
      %1493 = vmatprep.subr.bf16.mxu0 0
      %1494 = vmatpush1.bf16.msra.mxu0 0
      %1495 = vmatprep.subr.bf16.mxu0 0
      %1496 = vmatpush1.bf16.msra.mxu0 0
      %1497 = vmatprep.subr.bf16.mxu0 0
      %1498 = vmatpush1.bf16.msra.mxu0 0
      %1499 = vmatprep.subr.bf16.mxu0 0
      %1500 = vmatpush1.bf16.msra.mxu0 0
      %1501 = vmatprep.subr.bf16.mxu0 %v1491
      %1502 = vmatpush1.bf16.msra.mxu0 %v1488
      %1503 = vmatprep.subr.bf16.mxu0 %v1481
      %1504 = vmatpush1.bf16.msra.mxu0 %v1480
      %1505 = vmatprep.subr.bf16.mxu0 %v1479
      %1506 = vmatpush1.bf16.msra.mxu0 %v1478
      %1507 = vmatprep.subr.bf16.mxu0 %v1477
      %1508 = vmatpush1.bf16.msra.mxu0 %v1476
      %1509 = vmatprep.subr.bf16.mxu0 0
      %1510 = vmatpush2.bf16.msra.mxu0 0
      %1511 = vmatprep.subr.bf16.mxu0 0
      %1512 = vmatpush2.bf16.msra.mxu0 0
      %1513 = vmatprep.subr.bf16.mxu0 0
      %1514 = vmatpush2.bf16.msra.mxu0 0
      %1515 = vmatprep.subr.bf16.mxu0 0
      %1516 = vmatpush2.bf16.msra.mxu0 0
      %1517 = vmatprep.subr.bf16.mxu0 0
      %1518 = vmatpush2.bf16.msra.mxu0 0
      %1519 = vmatprep.subr.bf16.mxu0 0
      %1520 = vmatpush2.bf16.msra.mxu0 0
      %1521 = vmatprep.subr.bf16.mxu0 0
      %1522 = vmatpush2.bf16.msra.mxu0 0
      %1523 = vmatprep.subr.bf16.mxu0 0
      %1524 = vmatpush2.bf16.msra.mxu0 0
      %1525 = vmatprep.mubr.bf16.mxu0 0
      %1526 = vmatmul.mubr.bf16.gmra.mxu0 %v1485
      %v1527 = vpop.f32.mrf.mxu0
      %v1528 = vadd.f32 0.0, %v1527
      %v1529 = vpop.f32.mrf.mxu0
      %v1530 = vadd.f32 0.0, %v1529
      %v1531 = vpop.f32.mrf.mxu0
      %v1532 = vpop.f32.mrf.mxu0
      %1533 = vdwg.mxu0
      %v1534 = vsel %vm1052, %v1528, 0.0
      %v1535 = vsel %vm1053, %v1530, 0.0
      %1536 = vrot.lane.b32.xlu0 %v1534, 48
      %v1537 = vpop.permute.xlu0 %1536
      %1538 = vrot.lane.b32.xlu0 %v1535, 48
      %v1539 = vpop.permute.xlu0 %1538
      %v1540 = vsel %vm659, %v1537, %v1539
      %v1541 = vsel %vm659, %v1539, %v1537
      %v1542 = vsel %vm664, %v1541, 0.0
      %v1543 = vsel %vm665, %v1540, 0.0
      %1544 = vrot.lane.b32.xlu0 %v1534, 32
      %v1545 = vpop.permute.xlu0 %1544
      %1546 = vrot.lane.b32.xlu0 %v1535, 32
      %v1547 = vpop.permute.xlu0 %1546
      %v1548 = vsel %vm672, %v1545, %v1547
      %v1549 = vsel %vm672, %v1547, %v1545
      %v1550 = vsel %vm677, %v1549, 0.0
      %v1551 = vsel %vm678, %v1548, 0.0
      %1552 = vrot.lane.b32.xlu0 %v1534, 16
      %v1553 = vpop.permute.xlu0 %1552
      %1554 = vrot.lane.b32.xlu0 %v1535, 16
      %v1555 = vpop.permute.xlu0 %1554
      %v1556 = vsel %vm685, %v1553, %v1555
      %v1557 = vsel %vm685, %v1555, %v1553
      %v1558 = vsel %vm690, %v1557, 0.0
      %v1559 = vsel %vm691, %v1556, 0.0
      %1560 = vrot.lane.b32.xlu0 %v1534, 112
      %v1561 = vpop.permute.xlu0 %1560
      %1562 = vrot.lane.b32.xlu0 %v1535, 112
      %v1563 = vpop.permute.xlu0 %1562
      %v1564 = vsel %vm698, %v1561, %v1563
      %v1565 = vsel %vm698, %v1563, %v1561
      %v1566 = vsel %vm703, %v1564, 0.0
      %v1567 = vsel %vm704, %v1565, 0.0
      %1568 = vrot.lane.b32.xlu0 %v1534, 96
      %v1569 = vpop.permute.xlu0 %1568
      %1570 = vrot.lane.b32.xlu0 %v1535, 96
      %v1571 = vpop.permute.xlu0 %1570
      %v1572 = vsel %vm711, %v1569, %v1571
      %v1573 = vsel %vm711, %v1571, %v1569
      %v1574 = vsel %vm716, %v1572, 0.0
      %v1575 = vsel %vm717, %v1573, 0.0
      %1576 = vrot.lane.b32.xlu0 %v1534, 80
      %v1577 = vpop.permute.xlu0 %1576
      %1578 = vrot.lane.b32.xlu0 %v1535, 80
      %v1579 = vpop.permute.xlu0 %1578
      %v1580 = vsel %vm724, %v1577, %v1579
      %v1581 = vsel %vm724, %v1579, %v1577
      %v1582 = vsel %vm729, %v1580, 0.0
      %v1583 = vsel %vm730, %v1581, 0.0
      %v1584 = vld [vmem:[%s14] sm:$0xf]
      %v1585 = vpack.c.bf16 %v1550, %v1542
      %v1586 = vpack.c.bf16 %v1551, %v1543
      %v1587 = vpack.c.bf16 %v1534, %v1558
      %v1588 = vpack.c.bf16 %v1535, %v1559
      %v1589 = vpack.c.bf16 %v1574, %v1566
      %v1590 = vpack.c.bf16 %v1575, %v1567
      %v1591 = vpack.c.bf16 %v1582, %v1582
      %v1592 = vpack.c.bf16 %v1583, %v1583
      %v1593 = vld [vmem:[%s15] sm:$0xff]
      %1595 = vset.pattern.permute.xlu0 0
      %1596 = vperm.xlu0 %1595, %v1593
      %v1597 = vpop.permute.xlu0 %1596
      %v1600 = vsel %vm748, %v1584, 0
      %v1603 = vsel %vm752, %v1591, 0
      %v1606 = vsel %vm752, %v1592, 0
      %1608 = vmatprep.subr.bf16.mxu0 0
      %1609 = vmatpush1.bf16.msra.mxu0 0
      %1610 = vmatprep.subr.bf16.mxu0 0
      %1611 = vmatpush1.bf16.msra.mxu0 0
      %1612 = vmatprep.subr.bf16.mxu0 0
      %1613 = vmatpush1.bf16.msra.mxu0 0
      %1614 = vmatprep.subr.bf16.mxu0 0
      %1615 = vmatpush1.bf16.msra.mxu0 0
      %1616 = vmatprep.subr.bf16.mxu0 %v1606
      %1617 = vmatpush1.bf16.msra.mxu0 %v1603
      %1618 = vmatprep.subr.bf16.mxu0 %v1590
      %1619 = vmatpush1.bf16.msra.mxu0 %v1589
      %1620 = vmatprep.subr.bf16.mxu0 %v1588
      %1621 = vmatpush1.bf16.msra.mxu0 %v1587
      %1622 = vmatprep.subr.bf16.mxu0 %v1586
      %1623 = vmatpush1.bf16.msra.mxu0 %v1585
      %1624 = vmatprep.subr.bf16.mxu0 0
      %1625 = vmatpush2.bf16.msra.mxu0 0
      %1626 = vmatprep.subr.bf16.mxu0 0
      %1627 = vmatpush2.bf16.msra.mxu0 0
      %1628 = vmatprep.subr.bf16.mxu0 0
      %1629 = vmatpush2.bf16.msra.mxu0 0
      %1630 = vmatprep.subr.bf16.mxu0 0
      %1631 = vmatpush2.bf16.msra.mxu0 0
      %1632 = vmatprep.subr.bf16.mxu0 0
      %1633 = vmatpush2.bf16.msra.mxu0 0
      %1634 = vmatprep.subr.bf16.mxu0 0
      %1635 = vmatpush2.bf16.msra.mxu0 0
      %1636 = vmatprep.subr.bf16.mxu0 0
      %1637 = vmatpush2.bf16.msra.mxu0 0
      %1638 = vmatprep.subr.bf16.mxu0 0
      %1639 = vmatpush2.bf16.msra.mxu0 0
      %1640 = vmatprep.mubr.bf16.mxu0 0
      %1641 = vmatmul.mubr.bf16.gmra.mxu0 %v1600
      %v1642 = vpop.f32.mrf.mxu0
      %v1643 = vadd.f32 %v1597, %v1642
      %v1644 = vpop.f32.mrf.mxu0
      %v1645 = vadd.f32 %v1597, %v1644
      %v1646 = vpop.f32.mrf.mxu0
      %v1647 = vpop.f32.mrf.mxu0
      %1648 = vdwg.mxu0
      %v1649 = vld [vmem:[%s16] sm:$0xff]
      %1651 = vset.pattern.permute.xlu0 0
      %1652 = vperm.xlu0 %1651, %v1649
      %v1653 = vpop.permute.xlu0 %1652
      %v1655 = vsel %vm1052, %v1653, 0.0
      %v1656 = vsel %vm1053, %v1653, 0.0
      %v1657 = vadd.f32 %v1643, %v1655
      %v1658 = vadd.f32 %v1645, %v1656
      %v1659 = vadd.f32 %v1421, %v1657
      %v1660 = vadd.f32 %v1423, %v1658
      %v1661 = vadd.f32 %v1659, %v1660
      %1662 = vadd.xlane.f32.xlu0 %v1661
      %v1663 = vpop.xlane.xlu0 %1662
      %v1664 = vmul.f32 %v1663, 0.00390625
      %v1665 = vsub.f32 %v1659, %v1664
      %v1666 = vsub.f32 %v1660, %v1664
      %v1667 = vmul.f32 %v1665, %v1665
      %v1668 = vmul.f32 %v1666, %v1666
      %v1669 = vadd.f32 %v1667, %v1668
      %1670 = vadd.xlane.f32.xlu0 %v1669
      %v1671 = vpop.xlane.xlu0 %1670
      %v1672 = vmul.f32 %v1671, 0.00390625
      %v1673 = vadd.f32 %v1672, 1e-05
      %v1674 = vrsqrt.pop %v1673
      %v1675 = vmul.f32 %v1665, %v1674
      %v1676 = vmul.f32 %v1666, %v1674
      %v1677 = vmul.f32 %v1675, 0.2
      %v1678 = vmul.f32 %v1676, 0.2
      %v1679 = vmax.f32 %v1675, %v1677
      %v1680 = vmax.f32 %v1676, %v1678
      %1681 = vst [vmem:[%s548] sm:$0xff] %v1679
      %1682 = vst [vmem:[%s548 + $0x8] sm:$0xff] %v1680
      %p1683 = scmp.lt.s32.totalorder %s28, 1
      %s1684 = scalar_select %p1683, %s28, 1
      %s1685 = smul.addr %s1684, 2
      %s1686 = smul.addr %s1685, 8
      %s1687 = scalar_lea.vmem %s17, %s1686
      // Predicated region
      $region89: #{gcn_unet_block_down_forward.1} parent=87 // pred_check
        %p1688 = pneg %p408
      $region90: #{gcn_unet_block_down_forward.1} parent=87 // pred_check_branch
        %1690 = sbr.rel (%p1688) target = $region92
      $region91: #{gcn_unet_block_down_forward.1} parent=87 // pred_region
        _
      $region92: #{gcn_unet_block_down_forward.1} parent=87 // pred_fallthru
        _
    $region88: #{gcn_unet_block_down_forward.1} parent=5 // pred_fallthru
      _
    %p1691 = scmp.le.s32.totalorder 2, %s23
    // Predicated region
    $region93: #{gcn_unet_block_down_forward.1} parent=5 // pred_check
      %p1692 = pneg %p1691
    $region94: #{gcn_unet_block_down_forward.1} parent=5 // pred_check_branch
      %1694 = sbr.rel (%p1692) target = $region96
    $region95: #{gcn_unet_block_down_forward.1} parent=5 // pred_region
      %s1695 = ssub.s32 %s23, 2
      // Predicated region
      $region97: #{gcn_unet_block_down_forward.1} parent=95 // pred_check
        %p1696 = pneg %p414
      $region98: #{gcn_unet_block_down_forward.1} parent=95 // pred_check_branch
        %1698 = sbr.rel (%p1696) target = $region100
      $region99: #{gcn_unet_block_down_forward.1} parent=95 // pred_region
        %p1699 = scmp.lt.s32.totalorder %s29, 1
        %s1700 = scalar_select %p1699, %s29, 1
        %s1701 = smul.addr %s1700, 2
        %s1702 = smul.addr %s1701, 8
        %s1703 = scalar_lea.vmem %s17, %s1702
      $region100: #{gcn_unet_block_down_forward.1} parent=95 // pred_fallthru
        _
    $region96: #{gcn_unet_block_down_forward.1} parent=5 // pred_fallthru
      _
  $region6: #{gcn_unet_block_down_forward.1} parent=0 // loop_footer
    %s27 = sadd.s32 1, %s23
  $region7: #{gcn_unet_block_down_forward.1} parent=0 // loop_footer_branch
    %22 = sbr.rel target = $region3
  $region8: #{gcn_unet_block_down_forward.1} parent=0 // loop_exit
    _

</llo_original>
